<compile_context>
chip_gen: v7x
topology: tpu7x:2x2x1
jax: 0.10.0
libtpu: 0.0.40
codegen_flags: <defaults>
</compile_context>

<pallas_src>
import jax
import jax.numpy as jnp
from jax.experimental import pallas as pl
from jax.experimental.pallas import tpu as pltpu


def mm_gated_fusion_kernel(xt_ref, xi_ref, wt_ref, bt_ref, wi_ref, bi_ref,
                           gmat_ref, bg_ref, out_ref):
    N, F = xt_ref.shape          # N = block_b * L rows (batch-major), F lanes
    G = bt_ref.shape[1]
    BB = gmat_ref.shape[0]       # batch elements in this block
    L = N // BB                  # sequence length

    xt = xt_ref[...]             # (N, F)
    xi = xi_ref[...]             # (N, F)

    # Boundary masks, hoisted once and shared by both convs: (N, 1) f32 masks,
    # lane-broadcast by the VPU multiply.  They zero the Conv1d padding rows
    # (l == 0 / l == L-1) and also guard the cross-batch / cross-block roll wrap.
    pos = jax.lax.broadcasted_iota(jnp.int32, (N, 1), 0) % L
    keep_prev = (pos != 0).astype(jnp.float32)
    keep_next = (pos != (L - 1)).astype(jnp.float32)

    def conv3_tanh(x, w_stack, b_row):
        # One stacked MXU matmul for all three taps and the whole batch block:
        #   z[:, k*G:(k+1)*G] = x @ W_k  with  W_k[f, g] = torch_weight[g, f, k]
        z = jnp.dot(x.astype(w_stack.dtype), w_stack,
                    preferred_element_type=jnp.float32)               # (N, 3G)
        z_prev, z_mid, z_next = z[:, :G], z[:, G:2 * G], z[:, 2 * G:]
        # tap k=0 needs x[l-1]: shift rows down by one, zero where l == 0
        zp = pltpu.roll(z_prev, shift=1, axis=0) * keep_prev
        # tap k=2 needs x[l+1]: shift rows up by one, zero where l == L-1
        zn = pltpu.roll(z_next, shift=N - 1, axis=0) * keep_next
        return jnp.tanh(zp + z_mid + zn + b_row)                      # (N, G)

    # (Block-diagonal text/image conv fusion would help tiny F; skipped because
    #  it wastes FLOPs for realistic F — maximizing block_b covers the small case.)
    s = (conv3_tanh(xt, wt_ref[...], bt_ref[...])
         + conv3_tanh(xi, wi_ref[...], bi_ref[...]))                  # (N, G) f32

    # Gate Linear over the length axis for ALL batch rows at once: the gate
    # weight is folded into the block-diagonal gmat, so this is one MXU matmul
    # and one sigmoid for the whole block (no per-batch Python loop).
    gates = jax.nn.sigmoid(
        jnp.dot(gmat_ref[...], s, preferred_element_type=jnp.float32)
        + bg_ref[0, 0])                                               # (BB, G)

    # Broadcast each batch element's gate row back to its L sequence rows with
    # a 0/1 indicator matmul (keeps everything 2D / lane-dense; narrow-K MXU op
    # on an otherwise idle MXU slot).
    row_idx = jax.lax.broadcasted_iota(jnp.int32, (N, BB), 0)
    blk_lo = jax.lax.broadcasted_iota(jnp.int32, (N, BB), 1) * L
    ind = jnp.logical_and(row_idx >= blk_lo, row_idx < blk_lo + L)
    g_rows = jnp.dot(ind.astype(jnp.float32), gates,
                     preferred_element_type=jnp.float32)              # (N, F)

    # Lane-dense (N, 2F) output block: [g * text | (1 - g) * image] per row.
    out_ref[:, :F] = (g_rows * xt).astype(out_ref.dtype)
    out_ref[:, F:] = (xi - g_rows * xi).astype(out_ref.dtype)


def mm_gated_fusion(text, image, params, *, block_b=None, mxu_dtype=None):
    """text, image: (B, L, feature_dim).  Returns (B, 2*feature_dim, L)."""
    B, L, F = text.shape
    G, Fw, K = params["conv_text_w"].shape
    assert Fw == F and K == 3
    # Inherited from the PyTorch module (gate Linear over the length axis, gate
    # value broadcast against the channel axis):
    assert L == G and G == F, "module requires seq_len == gate_dim == feature_dim"

    in_dtype = text.dtype
    if mxu_dtype is None:
        # bf16 inputs run the conv matmuls natively in bf16 (f32 accumulate);
        # f32 inputs keep f32 weights so accuracy matches the f32 reference.
        mxu_dtype = jnp.bfloat16 if in_dtype == jnp.bfloat16 else jnp.float32

    # Generation-aware VMEM budget with headroom for compiler scratch:
    #   v7x (64 MiB physical)  -> ~51 MiB budget
    #   v5e/v6e (128 MiB)      -> ~102 MiB budget
    try:
        vmem_cap = int(pltpu.get_tpu_info().vmem_capacity_bytes)
    except Exception:
        vmem_cap = 64 * 2 ** 20
    vmem_budget = max(16 * 2 ** 20,
                      min(int(vmem_cap * 0.8), vmem_cap - 8 * 2 ** 20))

    in_item = jnp.dtype(in_dtype).itemsize
    w_item = jnp.dtype(mxu_dtype).itemsize

    def block_bytes(bb):
        n = bb * L
        act = 2 * (2 * n * F * in_item)                 # text + image blocks, double-buffered
        out = 2 * (n * 2 * F * in_item)                 # output block, double-buffered
        wts = 2 * (F * 3 * G * w_item)                  # stacked conv weights, single-buffered
        small = 2 * 8 * 3 * G * 4 + max(bb, 8) * ((n + 127) // 128) * 128 * 4
        tmps = (n * 3 * G + 2 * n * G + n * 128) * 4    # f32 in-kernel temporaries headroom
        return act + out + wts + small + tmps

    if block_b is None:
        block_b = 1
        if B > 1 and L % 8 == 0:
            max_bb = B // 2                             # keep >= 2 grid steps (v7x has 2 TCs)
            for bb in range(1, max_bb + 1):
                if B % bb:
                    continue
                if bb * L > 2048:                       # target ~512-2048 rows per grid step
                    break
                if block_bytes(bb) <= vmem_budget:
                    block_b = bb
    assert B % block_b == 0
    grid = (B // block_b,)
    n_rows = block_b * L

    # (B, L, F) -> (B*L, F): row-major merge, no data movement in HBM.
    text2 = text.reshape(B * L, F)
    image2 = image.reshape(B * L, F)

    def stack_w(w):   # torch (G, F, 3) -> (F, 3G); column block k holds tap k
        return jnp.transpose(w, (1, 2, 0)).reshape(F, 3 * G).astype(mxu_dtype)

    wt = stack_w(params["conv_text_w"])
    wi = stack_w(params["conv_image_w"])
    bt = params["conv_text_b"].reshape(1, G).astype(jnp.float32)
    bi = params["conv_image_b"].reshape(1, G).astype(jnp.float32)
    # Gate Linear weight (1, gate_dim) acts over the length axis; fold it into a
    # block-diagonal (block_b, n_rows) reduce matrix (row b carries gate_w over
    # the rows of batch element b).  No (n_rows, 1) tile needed anymore.
    gw = params["gate_w"].reshape(L).astype(jnp.float32)
    gmat = jnp.kron(jnp.eye(block_b, dtype=jnp.float32), gw[None, :])
    bg = params["gate_b"].reshape(1, 1).astype(jnp.float32)

    vmem_limit = int(min(vmem_budget, max(32 * 2 ** 20, block_bytes(block_b))))

    def run(single_buffer_consts):
        kw = dict(pipeline_mode=pl.Buffered(1)) if single_buffer_consts else {}
        in_specs = [
            pl.BlockSpec((n_rows, F), lambda i: (i, 0)),              # text rows  (B*L, F)
            pl.BlockSpec((n_rows, F), lambda i: (i, 0)),              # image rows (B*L, F)
            pl.BlockSpec((F, 3 * G), lambda i: (0, 0), **kw),         # conv_text stacked weight
            pl.BlockSpec((1, G), lambda i: (0, 0), **kw),             # conv_text bias
            pl.BlockSpec((F, 3 * G), lambda i: (0, 0), **kw),         # conv_image stacked weight
            pl.BlockSpec((1, G), lambda i: (0, 0), **kw),             # conv_image bias
            pl.BlockSpec((block_b, n_rows), lambda i: (0, 0), **kw),  # gate reduce matrix
            pl.BlockSpec(memory_space=pltpu.MemorySpace.SMEM),        # gate bias scalar
        ]
        out_specs = pl.BlockSpec((n_rows, 2 * F), lambda i: (i, 0))   # lane-dense output
        return pl.pallas_call(
            mm_gated_fusion_kernel,
            out_shape=jax.ShapeDtypeStruct((B * L, 2 * F), in_dtype),
            grid=grid,
            in_specs=in_specs,
            out_specs=out_specs,
            compiler_params=pltpu.CompilerParams(
                dimension_semantics=("parallel",),
                vmem_limit_bytes=vmem_limit),
        )(text2, image2, wt, bt, wi, bi, gmat, bg)

    try:
        out2 = run(True)
    except Exception:
        # Compatibility fallback if this jax build rejects pipeline_mode=Buffered(1).
        out2 = run(False)

    # Single wrapper-side relayout to the module's channel-first (B, 2F, L) output
    # (torch.cat(dim=1) on NCL).
    return jnp.transpose(out2.reshape(B, L, 2 * F), (0, 2, 1))


def reference(text, image, params):
    """Pure-JAX reproduction of the PyTorch forward for verification."""
    xt = jnp.transpose(text, (0, 2, 1))   # (B, F, L)
    xi = jnp.transpose(image, (0, 2, 1))

    def conv(x, w, b):  # x (B,F,L), w (G,F,3), b (G,)
        L = x.shape[2]
        xp = jnp.pad(x, ((0, 0), (0, 0), (1, 1)))
        y = sum(jnp.einsum('gf,bfl->bgl', w[:, :, k], xp[:, :, k:k + L])
                for k in range(3))
        return y + b[None, :, None]

    ct = jnp.tanh(conv(xt, params["conv_text_w"], params["conv_text_b"]))
    ci = jnp.tanh(conv(xi, params["conv_image_w"], params["conv_image_b"]))
    s = ct + ci                                                   # (B, G, L)
    g = jax.nn.sigmoid(jnp.einsum('bgl,ol->bgo', s, params["gate_w"])
                       + params["gate_b"])                        # (B, G, 1)
    return jnp.concatenate([g * xt, (1.0 - g) * xi], axis=1)      # (B, 2F, L)


def init_params(key, feature_dim, gate_dim):
    """Deterministic synthetic parameters in torch-native layouts."""
    ks = jax.random.split(key, 6)
    return {
        "conv_text_w": 0.1 * jax.random.normal(ks[0], (gate_dim, feature_dim, 3), jnp.float32),
        "conv_text_b": 0.1 * jax.random.normal(ks[1], (gate_dim,), jnp.float32),
        "conv_image_w": 0.1 * jax.random.normal(ks[2], (gate_dim, feature_dim, 3), jnp.float32),
        "conv_image_b": 0.1 * jax.random.normal(ks[3], (gate_dim,), jnp.float32),
        "gate_w": 0.1 * jax.random.normal(ks[4], (1, gate_dim), jnp.float32),
        "gate_b": 0.1 * jax.random.normal(ks[5], (1,), jnp.float32),
    }


if __name__ == "__main__":
    # The reference module requires L == gate_dim == feature_dim (see note above).
    feature_dim = gate_dim = L = 16
    key = jax.random.PRNGKey(0)

    def check(B, **kw):
        k_text, k_img, k_param = jax.random.split(jax.random.fold_in(key, B), 3)
        text = jax.random.normal(k_text, (B, L, feature_dim), jnp.float32)
        image = jax.random.normal(k_img, (B, L, feature_dim), jnp.float32)
        params = init_params(k_param, feature_dim, gate_dim)

        out = jax.block_until_ready(mm_gated_fusion(text, image, params, **kw))
        ref = jax.block_until_ready(reference(text, image, params))

        assert out.shape == (B, 2 * feature_dim, L), out.shape
        err = float(jnp.max(jnp.abs(out - ref)))
        assert err < 1e-4, err

    check(2)                # auto block_b (=1), grid of 2
    check(4, block_b=2)     # multi-batch block: exercises the BB > 1 gate path
    print("KERNEL_OK")
</pallas_src>

<mosaic_0001>
module attributes {stable_mosaic.version = 11 : i64} {
  func.func @mm_gated_fusion_kernel(%arg0: i32, %arg1: memref<16x16xf32, #tpu.memory_space<vmem>>, %arg2: memref<16x16xf32, #tpu.memory_space<vmem>>, %arg3: memref<16x48xf32, #tpu.memory_space<vmem>>, %arg4: memref<1x16xf32, #tpu.memory_space<vmem>>, %arg5: memref<16x48xf32, #tpu.memory_space<vmem>>, %arg6: memref<1x16xf32, #tpu.memory_space<vmem>>, %arg7: memref<1x16xf32, #tpu.memory_space<vmem>>, %arg8: memref<1x1xf32, #tpu.memory_space<smem>>, %arg9: memref<16x32xf32, #tpu.memory_space<vmem>>) attributes {dimension_semantics = [#tpu.dimension_semantics<parallel>], iteration_bounds = array<i64: 2>, scalar_prefetch = 0 : i64, scratch_operands = 0 : i64, tpu.core_type = #tpu.core_type<tc>, window_params = [{transform_indices = @transform_0, window_bounds = array<i64: 16, 16>}, {transform_indices = @transform_1, window_bounds = array<i64: 16, 16>}, {pipeline_mode = #tpu.pipeline_mode<synchronous>, transform_indices = @transform_2, window_bounds = array<i64: 16, 48>}, {pipeline_mode = #tpu.pipeline_mode<synchronous>, transform_indices = @transform_3, window_bounds = array<i64: 1, 16>}, {pipeline_mode = #tpu.pipeline_mode<synchronous>, transform_indices = @transform_4, window_bounds = array<i64: 16, 48>}, {pipeline_mode = #tpu.pipeline_mode<synchronous>, transform_indices = @transform_5, window_bounds = array<i64: 1, 16>}, {pipeline_mode = #tpu.pipeline_mode<synchronous>, transform_indices = @transform_6, window_bounds = array<i64: 1, 16>}, {transform_indices = @transform_7, window_bounds = array<i64: 1, 1>}, {transform_indices = @transform_8, window_bounds = array<i64: 16, 32>}]} {
    %c0 = arith.constant 0 : index
    %c0_0 = arith.constant 0 : index
    %0 = vector.load %arg1[%c0, %c0_0] : memref<16x16xf32, #tpu.memory_space<vmem>>, vector<16x16xf32>
    %c0_1 = arith.constant 0 : index
    %c0_2 = arith.constant 0 : index
    %1 = vector.load %arg2[%c0_1, %c0_2] : memref<16x16xf32, #tpu.memory_space<vmem>>, vector<16x16xf32>
    %2 = tpu.iota {dimensions = array<i32: 0>} : vector<16x1xi32>
    %c16_i32 = arith.constant 16 : i32
    %c0_i32 = arith.constant 0 : i32
    %3 = arith.cmpi eq, %c16_i32, %c0_i32 : i32
    %c1_i32 = arith.constant 1 : i32
    %4 = arith.select %3, %c1_i32, %c16_i32 : i32
    %5 = vector.broadcast %4 : i32 to vector<16x1xi32>
    %6 = arith.remsi %2, %5 : vector<16x1xi32>
    %c0_i32_3 = arith.constant 0 : i32
    %7 = vector.broadcast %c0_i32_3 : i32 to vector<16x1xi32>
    %8 = arith.cmpi ne, %6, %7 : vector<16x1xi32>
    %c0_i32_4 = arith.constant 0 : i32
    %9 = vector.broadcast %c0_i32_4 : i32 to vector<16x1xi32>
    %10 = arith.cmpi slt, %6, %9 : vector<16x1xi32>
    %c0_i32_5 = arith.constant 0 : i32
    %11 = arith.cmpi slt, %4, %c0_i32_5 : i32
    %12 = vector.broadcast %11 : i1 to vector<16x1xi1>
    %13 = vector.broadcast %12 : vector<16x1xi1> to vector<16x1xi1>
    %14 = arith.xori %10, %13 : vector<16x1xi1>
    %15 = arith.andi %14, %8 : vector<16x1xi1>
    %16 = vector.broadcast %4 : i32 to vector<16x1xi32>
    %17 = arith.addi %6, %16 : vector<16x1xi32>
    %18 = arith.select %15, %17, %6 : vector<16x1xi1>, vector<16x1xi32>
    %c0_i32_6 = arith.constant 0 : i32
    %19 = vector.broadcast %c0_i32_6 : i32 to vector<16x1xi32>
    %20 = arith.cmpi ne, %18, %19 : vector<16x1xi32>
    %21 = arith.extui %20 : vector<16x1xi1> to vector<16x1xi32>
    %22 = arith.sitofp %21 : vector<16x1xi32> to vector<16x1xf32>
    %c15_i32 = arith.constant 15 : i32
    %23 = vector.broadcast %c15_i32 : i32 to vector<16x1xi32>
    %24 = arith.cmpi ne, %18, %23 : vector<16x1xi32>
    %25 = arith.extui %24 : vector<16x1xi1> to vector<16x1xi32>
    %26 = arith.sitofp %25 : vector<16x1xi32> to vector<16x1xf32>
    %c0_7 = arith.constant 0 : index
    %c0_8 = arith.constant 0 : index
    %27 = vector.load %arg3[%c0_7, %c0_8] : memref<16x48xf32, #tpu.memory_space<vmem>>, vector<16x48xf32>
    %c0_9 = arith.constant 0 : index
    %c0_10 = arith.constant 0 : index
    %28 = vector.load %arg4[%c0_9, %c0_10] : memref<1x16xf32, #tpu.memory_space<vmem>>, vector<1x16xf32>
    %cst = arith.constant dense<0.000000e+00> : vector<16x48xf32>
    %29 = tpu.matmul %0, %27, %cst {dimension_numbers = #tpu.dot_dimension_numbers<[1], [0], [0], [1], [0, 0, 1, 1], [], []>} : vector<16x16xf32>, vector<16x48xf32>, vector<16x48xf32> -> vector<16x48xf32>
    %30 = vector.extract_strided_slice %29 {offsets = [0, 0], sizes = [16, 16], strides = [1, 1]} : vector<16x48xf32> to vector<16x16xf32>
    %31 = vector.extract_strided_slice %29 {offsets = [0, 16], sizes = [16, 16], strides = [1, 1]} : vector<16x48xf32> to vector<16x16xf32>
    %32 = vector.extract_strided_slice %29 {offsets = [0, 32], sizes = [16, 16], strides = [1, 1]} : vector<16x48xf32> to vector<16x16xf32>
    %c1_i32_11 = arith.constant 1 : i32
    %33 = tpu.dynamic_rotate %30 by %c1_i32_11 dim 0 : vector<16x16xf32>, i32 -> vector<16x16xf32>
    %34 = vector.broadcast %22 : vector<16x1xf32> to vector<16x16xf32>
    %35 = arith.mulf %33, %34 : vector<16x16xf32>
    %c15_i32_12 = arith.constant 15 : i32
    %36 = tpu.dynamic_rotate %32 by %c15_i32_12 dim 0 : vector<16x16xf32>, i32 -> vector<16x16xf32>
    %37 = vector.broadcast %26 : vector<16x1xf32> to vector<16x16xf32>
    %38 = arith.mulf %36, %37 : vector<16x16xf32>
    %39 = arith.addf %35, %31 : vector<16x16xf32>
    %40 = arith.addf %39, %38 : vector<16x16xf32>
    %41 = vector.broadcast %28 : vector<1x16xf32> to vector<16x16xf32>
    %42 = arith.addf %40, %41 : vector<16x16xf32>
    %43 = math.tanh %42 : vector<16x16xf32>
    %c0_13 = arith.constant 0 : index
    %c0_14 = arith.constant 0 : index
    %44 = vector.load %arg5[%c0_13, %c0_14] : memref<16x48xf32, #tpu.memory_space<vmem>>, vector<16x48xf32>
    %c0_15 = arith.constant 0 : index
    %c0_16 = arith.constant 0 : index
    %45 = vector.load %arg6[%c0_15, %c0_16] : memref<1x16xf32, #tpu.memory_space<vmem>>, vector<1x16xf32>
    %cst_17 = arith.constant dense<0.000000e+00> : vector<16x48xf32>
    %46 = tpu.matmul %1, %44, %cst_17 {dimension_numbers = #tpu.dot_dimension_numbers<[1], [0], [0], [1], [0, 0, 1, 1], [], []>} : vector<16x16xf32>, vector<16x48xf32>, vector<16x48xf32> -> vector<16x48xf32>
    %47 = vector.extract_strided_slice %46 {offsets = [0, 0], sizes = [16, 16], strides = [1, 1]} : vector<16x48xf32> to vector<16x16xf32>
    %48 = vector.extract_strided_slice %46 {offsets = [0, 16], sizes = [16, 16], strides = [1, 1]} : vector<16x48xf32> to vector<16x16xf32>
    %49 = vector.extract_strided_slice %46 {offsets = [0, 32], sizes = [16, 16], strides = [1, 1]} : vector<16x48xf32> to vector<16x16xf32>
    %c1_i32_18 = arith.constant 1 : i32
    %50 = tpu.dynamic_rotate %47 by %c1_i32_18 dim 0 : vector<16x16xf32>, i32 -> vector<16x16xf32>
    %51 = vector.broadcast %22 : vector<16x1xf32> to vector<16x16xf32>
    %52 = arith.mulf %50, %51 : vector<16x16xf32>
    %c15_i32_19 = arith.constant 15 : i32
    %53 = tpu.dynamic_rotate %49 by %c15_i32_19 dim 0 : vector<16x16xf32>, i32 -> vector<16x16xf32>
    %54 = vector.broadcast %26 : vector<16x1xf32> to vector<16x16xf32>
    %55 = arith.mulf %53, %54 : vector<16x16xf32>
    %56 = arith.addf %52, %48 : vector<16x16xf32>
    %57 = arith.addf %56, %55 : vector<16x16xf32>
    %58 = vector.broadcast %45 : vector<1x16xf32> to vector<16x16xf32>
    %59 = arith.addf %57, %58 : vector<16x16xf32>
    %60 = math.tanh %59 : vector<16x16xf32>
    %61 = arith.addf %43, %60 : vector<16x16xf32>
    %c0_20 = arith.constant 0 : index
    %c0_21 = arith.constant 0 : index
    %62 = vector.load %arg7[%c0_20, %c0_21] : memref<1x16xf32, #tpu.memory_space<vmem>>, vector<1x16xf32>
    %cst_22 = arith.constant dense<0.000000e+00> : vector<1x16xf32>
    %63 = tpu.matmul %62, %61, %cst_22 {dimension_numbers = #tpu.dot_dimension_numbers<[1], [0], [0], [1], [0, 0, 1, 1], [], []>} : vector<1x16xf32>, vector<16x16xf32>, vector<1x16xf32> -> vector<1x16xf32>
    %c0_23 = arith.constant 0 : index
    %c0_24 = arith.constant 0 : index
    %64 = memref.load %arg8[%c0_23, %c0_24] : memref<1x1xf32, #tpu.memory_space<smem>>
    %65 = vector.broadcast %64 : f32 to vector<1x16xf32>
    %66 = arith.addf %63, %65 : vector<1x16xf32>
    %67 = arith.negf %66 : vector<1x16xf32>
    %68 = math.exp %67 : vector<1x16xf32>
    %cst_25 = arith.constant 1.000000e+00 : f32
    %69 = vector.broadcast %cst_25 : f32 to vector<1x16xf32>
    %70 = arith.addf %69, %68 : vector<1x16xf32>
    %71 = arith.divf %69, %70 : vector<1x16xf32>
    %72 = tpu.iota {dimensions = array<i32: 0>} : vector<16x1xi32>
    %73 = tpu.iota {dimensions = array<i32: 1>} : vector<16x1xi32>
    %c16_i32_26 = arith.constant 16 : i32
    %74 = vector.broadcast %c16_i32_26 : i32 to vector<16x1xi32>
    %75 = arith.muli %73, %74 : vector<16x1xi32>
    %76 = arith.cmpi sge, %72, %75 : vector<16x1xi32>
    %c16_i32_27 = arith.constant 16 : i32
    %77 = vector.broadcast %c16_i32_27 : i32 to vector<16x1xi32>
    %78 = arith.addi %75, %77 : vector<16x1xi32>
    %79 = arith.cmpi slt, %72, %78 : vector<16x1xi32>
    %80 = arith.andi %76, %79 : vector<16x1xi1>
    %81 = arith.extui %80 : vector<16x1xi1> to vector<16x1xi32>
    %82 = arith.sitofp %81 : vector<16x1xi32> to vector<16x1xf32>
    %cst_28 = arith.constant dense<0.000000e+00> : vector<16x16xf32>
    %83 = tpu.matmul %82, %71, %cst_28 {dimension_numbers = #tpu.dot_dimension_numbers<[1], [0], [0], [1], [0, 0, 1, 1], [], []>} : vector<16x1xf32>, vector<1x16xf32>, vector<16x16xf32> -> vector<16x16xf32>
    %84 = arith.mulf %83, %0 : vector<16x16xf32>
    %c0_29 = arith.constant 0 : index
    %c0_30 = arith.constant 0 : index
    %85 = vector.load %arg9[%c0_29, %c0_30] : memref<16x32xf32, #tpu.memory_space<vmem>>, vector<16x16xf32>
    tpu.vector_store %arg9[%c0_29, %c0_30], %84 {strides = array<i32>} : memref<16x32xf32, #tpu.memory_space<vmem>>, vector<16x16xf32>,
    %86 = arith.mulf %83, %1 : vector<16x16xf32>
    %87 = arith.subf %1, %86 : vector<16x16xf32>
    %c0_31 = arith.constant 0 : index
    %c16 = arith.constant 16 : index
    %88 = vector.load %arg9[%c0_31, %c16] : memref<16x32xf32, #tpu.memory_space<vmem>>, vector<16x16xf32>
    tpu.vector_store %arg9[%c0_31, %c16], %87 {strides = array<i32>} : memref<16x32xf32, #tpu.memory_space<vmem>>, vector<16x16xf32>,
    return
  }
  func.func @transform_0(%arg0: i32) -> (i32, i32) {
    %c0_i32 = arith.constant 0 : i32
    %c0_i32_0 = arith.constant 0 : i32
    return %arg0, %c0_i32 : i32, i32
  }
  func.func @transform_1(%arg0: i32) -> (i32, i32) {
    %c0_i32 = arith.constant 0 : i32
    %c0_i32_0 = arith.constant 0 : i32
    return %arg0, %c0_i32 : i32, i32
  }
  func.func @transform_2(%arg0: i32) -> (i32, i32) {
    %c0_i32 = arith.constant 0 : i32
    %c0_i32_0 = arith.constant 0 : i32
    %c0_i32_1 = arith.constant 0 : i32
    return %c0_i32, %c0_i32_0 : i32, i32
  }
  func.func @transform_3(%arg0: i32) -> (i32, i32) {
    %c0_i32 = arith.constant 0 : i32
    %c0_i32_0 = arith.constant 0 : i32
    %c0_i32_1 = arith.constant 0 : i32
    return %c0_i32, %c0_i32_0 : i32, i32
  }
  func.func @transform_4(%arg0: i32) -> (i32, i32) {
    %c0_i32 = arith.constant 0 : i32
    %c0_i32_0 = arith.constant 0 : i32
    %c0_i32_1 = arith.constant 0 : i32
    return %c0_i32, %c0_i32_0 : i32, i32
  }
  func.func @transform_5(%arg0: i32) -> (i32, i32) {
    %c0_i32 = arith.constant 0 : i32
    %c0_i32_0 = arith.constant 0 : i32
    %c0_i32_1 = arith.constant 0 : i32
    return %c0_i32, %c0_i32_0 : i32, i32
  }
  func.func @transform_6(%arg0: i32) -> (i32, i32) {
    %c0_i32 = arith.constant 0 : i32
    %c0_i32_0 = arith.constant 0 : i32
    %c0_i32_1 = arith.constant 0 : i32
    return %c0_i32, %c0_i32_0 : i32, i32
  }
  func.func @transform_7(%arg0: i32) -> (i32, i32) {
    %c0_i32 = arith.constant 0 : i32
    %c0_i32_0 = arith.constant 0 : i32
    %c0_i32_1 = arith.constant 0 : i32
    return %c0_i32, %c0_i32_0 : i32, i32
  }
  func.func @transform_8(%arg0: i32) -> (i32, i32) {
    %c0_i32 = arith.constant 0 : i32
    %c0_i32_0 = arith.constant 0 : i32
    return %arg0, %c0_i32 : i32, i32
  }
}

module attributes {stable_mosaic.version = 11 : i64} {
  func.func @mm_gated_fusion_kernel(%arg0: i32, %arg1: memref<16x16xf32, #tpu.memory_space<vmem>>, %arg2: memref<16x16xf32, #tpu.memory_space<vmem>>, %arg3: memref<16x48xf32, #tpu.memory_space<vmem>>, %arg4: memref<1x16xf32, #tpu.memory_space<vmem>>, %arg5: memref<16x48xf32, #tpu.memory_space<vmem>>, %arg6: memref<1x16xf32, #tpu.memory_space<vmem>>, %arg7: memref<1x16xf32, #tpu.memory_space<vmem>>, %arg8: memref<1x1xf32, #tpu.memory_space<smem>>, %arg9: memref<16x32xf32, #tpu.memory_space<vmem>>) attributes {dimension_semantics = [#tpu.dimension_semantics<parallel>], iteration_bounds = array<i64: 2>, scalar_prefetch = 0 : i64, scratch_operands = 0 : i64, tpu.core_type = #tpu.core_type<tc>, window_params = [{transform_indices = @transform_0, window_bounds = array<i64: 16, 16>}, {transform_indices = @transform_1, window_bounds = array<i64: 16, 16>}, {pipeline_mode = #tpu.pipeline_mode<synchronous>, transform_indices = @transform_2, window_bounds = array<i64: 16, 48>}, {pipeline_mode = #tpu.pipeline_mode<synchronous>, transform_indices = @transform_3, window_bounds = array<i64: 1, 16>}, {pipeline_mode = #tpu.pipeline_mode<synchronous>, transform_indices = @transform_4, window_bounds = array<i64: 16, 48>}, {pipeline_mode = #tpu.pipeline_mode<synchronous>, transform_indices = @transform_5, window_bounds = array<i64: 1, 16>}, {pipeline_mode = #tpu.pipeline_mode<synchronous>, transform_indices = @transform_6, window_bounds = array<i64: 1, 16>}, {transform_indices = @transform_7, window_bounds = array<i64: 1, 1>}, {transform_indices = @transform_8, window_bounds = array<i64: 16, 32>}]} {
    %c0 = arith.constant 0 : index
    %c0_0 = arith.constant 0 : index
    %0 = vector.load %arg1[%c0, %c0_0] : memref<16x16xf32, #tpu.memory_space<vmem>>, vector<16x16xf32>
    %c0_1 = arith.constant 0 : index
    %c0_2 = arith.constant 0 : index
    %1 = vector.load %arg2[%c0_1, %c0_2] : memref<16x16xf32, #tpu.memory_space<vmem>>, vector<16x16xf32>
    %2 = tpu.iota {dimensions = array<i32: 0>} : vector<16x1xi32>
    %c16_i32 = arith.constant 16 : i32
    %c0_i32 = arith.constant 0 : i32
    %3 = arith.cmpi eq, %c16_i32, %c0_i32 : i32
    %c1_i32 = arith.constant 1 : i32
    %4 = arith.select %3, %c1_i32, %c16_i32 : i32
    %5 = vector.broadcast %4 : i32 to vector<16x1xi32>
    %6 = arith.remsi %2, %5 : vector<16x1xi32>
    %c0_i32_3 = arith.constant 0 : i32
    %7 = vector.broadcast %c0_i32_3 : i32 to vector<16x1xi32>
    %8 = arith.cmpi ne, %6, %7 : vector<16x1xi32>
    %c0_i32_4 = arith.constant 0 : i32
    %9 = vector.broadcast %c0_i32_4 : i32 to vector<16x1xi32>
    %10 = arith.cmpi slt, %6, %9 : vector<16x1xi32>
    %c0_i32_5 = arith.constant 0 : i32
    %11 = arith.cmpi slt, %4, %c0_i32_5 : i32
    %12 = vector.broadcast %11 : i1 to vector<16x1xi1>
    %13 = vector.broadcast %12 : vector<16x1xi1> to vector<16x1xi1>
    %14 = arith.xori %10, %13 : vector<16x1xi1>
    %15 = arith.andi %14, %8 : vector<16x1xi1>
    %16 = vector.broadcast %4 : i32 to vector<16x1xi32>
    %17 = arith.addi %6, %16 : vector<16x1xi32>
    %18 = arith.select %15, %17, %6 : vector<16x1xi1>, vector<16x1xi32>
    %c0_i32_6 = arith.constant 0 : i32
    %19 = vector.broadcast %c0_i32_6 : i32 to vector<16x1xi32>
    %20 = arith.cmpi ne, %18, %19 : vector<16x1xi32>
    %21 = arith.extui %20 : vector<16x1xi1> to vector<16x1xi32>
    %22 = arith.sitofp %21 : vector<16x1xi32> to vector<16x1xf32>
    %c15_i32 = arith.constant 15 : i32
    %23 = vector.broadcast %c15_i32 : i32 to vector<16x1xi32>
    %24 = arith.cmpi ne, %18, %23 : vector<16x1xi32>
    %25 = arith.extui %24 : vector<16x1xi1> to vector<16x1xi32>
    %26 = arith.sitofp %25 : vector<16x1xi32> to vector<16x1xf32>
    %c0_7 = arith.constant 0 : index
    %c0_8 = arith.constant 0 : index
    %27 = vector.load %arg3[%c0_7, %c0_8] : memref<16x48xf32, #tpu.memory_space<vmem>>, vector<16x48xf32>
    %c0_9 = arith.constant 0 : index
    %c0_10 = arith.constant 0 : index
    %28 = vector.load %arg4[%c0_9, %c0_10] : memref<1x16xf32, #tpu.memory_space<vmem>>, vector<1x16xf32>
    %cst = arith.constant dense<0.000000e+00> : vector<16x48xf32>
    %29 = tpu.matmul %0, %27, %cst {dimension_numbers = #tpu.dot_dimension_numbers<[1], [0], [0], [1], [0, 0, 1, 1], [], []>} : vector<16x16xf32>, vector<16x48xf32>, vector<16x48xf32> -> vector<16x48xf32>
    %30 = vector.extract_strided_slice %29 {offsets = [0, 0], sizes = [16, 16], strides = [1, 1]} : vector<16x48xf32> to vector<16x16xf32>
    %31 = vector.extract_strided_slice %29 {offsets = [0, 16], sizes = [16, 16], strides = [1, 1]} : vector<16x48xf32> to vector<16x16xf32>
    %32 = vector.extract_strided_slice %29 {offsets = [0, 32], sizes = [16, 16], strides = [1, 1]} : vector<16x48xf32> to vector<16x16xf32>
    %c1_i32_11 = arith.constant 1 : i32
    %33 = tpu.dynamic_rotate %30 by %c1_i32_11 dim 0 : vector<16x16xf32>, i32 -> vector<16x16xf32>
    %34 = vector.broadcast %22 : vector<16x1xf32> to vector<16x16xf32>
    %35 = arith.mulf %33, %34 : vector<16x16xf32>
    %c15_i32_12 = arith.constant 15 : i32
    %36 = tpu.dynamic_rotate %32 by %c15_i32_12 dim 0 : vector<16x16xf32>, i32 -> vector<16x16xf32>
    %37 = vector.broadcast %26 : vector<16x1xf32> to vector<16x16xf32>
    %38 = arith.mulf %36, %37 : vector<16x16xf32>
    %39 = arith.addf %35, %31 : vector<16x16xf32>
    %40 = arith.addf %39, %38 : vector<16x16xf32>
    %41 = vector.broadcast %28 : vector<1x16xf32> to vector<16x16xf32>
    %42 = arith.addf %40, %41 : vector<16x16xf32>
    %43 = math.tanh %42 : vector<16x16xf32>
    %c0_13 = arith.constant 0 : index
    %c0_14 = arith.constant 0 : index
    %44 = vector.load %arg5[%c0_13, %c0_14] : memref<16x48xf32, #tpu.memory_space<vmem>>, vector<16x48xf32>
    %c0_15 = arith.constant 0 : index
    %c0_16 = arith.constant 0 : index
    %45 = vector.load %arg6[%c0_15, %c0_16] : memref<1x16xf32, #tpu.memory_space<vmem>>, vector<1x16xf32>
    %cst_17 = arith.constant dense<0.000000e+00> : vector<16x48xf32>
    %46 = tpu.matmul %1, %44, %cst_17 {dimension_numbers = #tpu.dot_dimension_numbers<[1], [0], [0], [1], [0, 0, 1, 1], [], []>} : vector<16x16xf32>, vector<16x48xf32>, vector<16x48xf32> -> vector<16x48xf32>
    %47 = vector.extract_strided_slice %46 {offsets = [0, 0], sizes = [16, 16], strides = [1, 1]} : vector<16x48xf32> to vector<16x16xf32>
    %48 = vector.extract_strided_slice %46 {offsets = [0, 16], sizes = [16, 16], strides = [1, 1]} : vector<16x48xf32> to vector<16x16xf32>
    %49 = vector.extract_strided_slice %46 {offsets = [0, 32], sizes = [16, 16], strides = [1, 1]} : vector<16x48xf32> to vector<16x16xf32>
    %c1_i32_18 = arith.constant 1 : i32
    %50 = tpu.dynamic_rotate %47 by %c1_i32_18 dim 0 : vector<16x16xf32>, i32 -> vector<16x16xf32>
    %51 = vector.broadcast %22 : vector<16x1xf32> to vector<16x16xf32>
    %52 = arith.mulf %50, %51 : vector<16x16xf32>
    %c15_i32_19 = arith.constant 15 : i32
    %53 = tpu.dynamic_rotate %49 by %c15_i32_19 dim 0 : vector<16x16xf32>, i32 -> vector<16x16xf32>
    %54 = vector.broadcast %26 : vector<16x1xf32> to vector<16x16xf32>
    %55 = arith.mulf %53, %54 : vector<16x16xf32>
    %56 = arith.addf %52, %48 : vector<16x16xf32>
    %57 = arith.addf %56, %55 : vector<16x16xf32>
    %58 = vector.broadcast %45 : vector<1x16xf32> to vector<16x16xf32>
    %59 = arith.addf %57, %58 : vector<16x16xf32>
    %60 = math.tanh %59 : vector<16x16xf32>
    %61 = arith.addf %43, %60 : vector<16x16xf32>
    %c0_20 = arith.constant 0 : index
    %c0_21 = arith.constant 0 : index
    %62 = vector.load %arg7[%c0_20, %c0_21] : memref<1x16xf32, #tpu.memory_space<vmem>>, vector<1x16xf32>
    %cst_22 = arith.constant dense<0.000000e+00> : vector<1x16xf32>
    %63 = tpu.matmul %62, %61, %cst_22 {dimension_numbers = #tpu.dot_dimension_numbers<[1], [0], [0], [1], [0, 0, 1, 1], [], []>} : vector<1x16xf32>, vector<16x16xf32>, vector<1x16xf32> -> vector<1x16xf32>
    %c0_23 = arith.constant 0 : index
    %c0_24 = arith.constant 0 : index
    %64 = memref.load %arg8[%c0_23, %c0_24] : memref<1x1xf32, #tpu.memory_space<smem>>
    %65 = vector.broadcast %64 : f32 to vector<1x16xf32>
    %66 = arith.addf %63, %65 : vector<1x16xf32>
    %67 = arith.negf %66 : vector<1x16xf32>
    %68 = math.exp %67 : vector<1x16xf32>
    %cst_25 = arith.constant 1.000000e+00 : f32
    %69 = vector.broadcast %cst_25 : f32 to vector<1x16xf32>
    %70 = arith.addf %69, %68 : vector<1x16xf32>
    %71 = arith.divf %69, %70 : vector<1x16xf32>
    %72 = tpu.iota {dimensions = array<i32: 0>} : vector<16x1xi32>
    %73 = tpu.iota {dimensions = array<i32: 1>} : vector<16x1xi32>
    %c16_i32_26 = arith.constant 16 : i32
    %74 = vector.broadcast %c16_i32_26 : i32 to vector<16x1xi32>
    %75 = arith.muli %73, %74 : vector<16x1xi32>
    %76 = arith.cmpi sge, %72, %75 : vector<16x1xi32>
    %c16_i32_27 = arith.constant 16 : i32
    %77 = vector.broadcast %c16_i32_27 : i32 to vector<16x1xi32>
    %78 = arith.addi %75, %77 : vector<16x1xi32>
    %79 = arith.cmpi slt, %72, %78 : vector<16x1xi32>
    %80 = arith.andi %76, %79 : vector<16x1xi1>
    %81 = arith.extui %80 : vector<16x1xi1> to vector<16x1xi32>
    %82 = arith.sitofp %81 : vector<16x1xi32> to vector<16x1xf32>
    %cst_28 = arith.constant dense<0.000000e+00> : vector<16x16xf32>
    %83 = tpu.matmul %82, %71, %cst_28 {dimension_numbers = #tpu.dot_dimension_numbers<[1], [0], [0], [1], [0, 0, 1, 1], [], []>} : vector<16x1xf32>, vector<1x16xf32>, vector<16x16xf32> -> vector<16x16xf32>
    %84 = arith.mulf %83, %0 : vector<16x16xf32>
    %c0_29 = arith.constant 0 : index
    %c0_30 = arith.constant 0 : index
    %85 = vector.load %arg9[%c0_29, %c0_30] : memref<16x32xf32, #tpu.memory_space<vmem>>, vector<16x16xf32>
    tpu.vector_store %arg9[%c0_29, %c0_30], %84 {strides = array<i32>} : memref<16x32xf32, #tpu.memory_space<vmem>>, vector<16x16xf32>,
    %86 = arith.mulf %83, %1 : vector<16x16xf32>
    %87 = arith.subf %1, %86 : vector<16x16xf32>
    %c0_31 = arith.constant 0 : index
    %c16 = arith.constant 16 : index
    %88 = vector.load %arg9[%c0_31, %c16] : memref<16x32xf32, #tpu.memory_space<vmem>>, vector<16x16xf32>
    tpu.vector_store %arg9[%c0_31, %c16], %87 {strides = array<i32>} : memref<16x32xf32, #tpu.memory_space<vmem>>, vector<16x16xf32>,
    return
  }
  func.func @transform_0(%arg0: i32) -> (i32, i32) {
    %c0_i32 = arith.constant 0 : i32
    %c0_i32_0 = arith.constant 0 : i32
    return %arg0, %c0_i32 : i32, i32
  }
  func.func @transform_1(%arg0: i32) -> (i32, i32) {
    %c0_i32 = arith.constant 0 : i32
    %c0_i32_0 = arith.constant 0 : i32
    return %arg0, %c0_i32 : i32, i32
  }
  func.func @transform_2(%arg0: i32) -> (i32, i32) {
    %c0_i32 = arith.constant 0 : i32
    %c0_i32_0 = arith.constant 0 : i32
    %c0_i32_1 = arith.constant 0 : i32
    return %c0_i32, %c0_i32_0 : i32, i32
  }
  func.func @transform_3(%arg0: i32) -> (i32, i32) {
    %c0_i32 = arith.constant 0 : i32
    %c0_i32_0 = arith.constant 0 : i32
    %c0_i32_1 = arith.constant 0 : i32
    return %c0_i32, %c0_i32_0 : i32, i32
  }
  func.func @transform_4(%arg0: i32) -> (i32, i32) {
    %c0_i32 = arith.constant 0 : i32
    %c0_i32_0 = arith.constant 0 : i32
    %c0_i32_1 = arith.constant 0 : i32
    return %c0_i32, %c0_i32_0 : i32, i32
  }
  func.func @transform_5(%arg0: i32) -> (i32, i32) {
    %c0_i32 = arith.constant 0 : i32
    %c0_i32_0 = arith.constant 0 : i32
    %c0_i32_1 = arith.constant 0 : i32
    return %c0_i32, %c0_i32_0 : i32, i32
  }
  func.func @transform_6(%arg0: i32) -> (i32, i32) {
    %c0_i32 = arith.constant 0 : i32
    %c0_i32_0 = arith.constant 0 : i32
    %c0_i32_1 = arith.constant 0 : i32
    return %c0_i32, %c0_i32_0 : i32, i32
  }
  func.func @transform_7(%arg0: i32) -> (i32, i32) {
    %c0_i32 = arith.constant 0 : i32
    %c0_i32_0 = arith.constant 0 : i32
    %c0_i32_1 = arith.constant 0 : i32
    return %c0_i32, %c0_i32_0 : i32, i32
  }
  func.func @transform_8(%arg0: i32) -> (i32, i32) {
    %c0_i32 = arith.constant 0 : i32
    %c0_i32_0 = arith.constant 0 : i32
    return %arg0, %c0_i32 : i32, i32
  }
}

</mosaic_0001>

<llo_original>
// kernel: tpu_custom_call.1
$region0: #{tpu_custom_call.1}
  #allocation0 [shape = 'u32[]', space=smem, size = 0x4, offset = 0x4, fixed_abs, tag = 'smem constant byte address 0x4 - core index']
  #allocation1 [shape = 'u32[144,128]{1,0:T(1,128)}', space=vmem, size = 0x12000, scoped, tag = 'internal scratch']
  #allocation2 [shape = 'f32[1,1]{1,0:T(1,128)S(6)}', space=smem, size = 0x200, scoped, tag = 'scoped memory for tpu_custom_call.1']
  %s0 = inlined_call_operand.vmem [shape: f32[32,16], index: 0, kind: input, shape index: {}]
  %s1 = inlined_call_operand.vmem [shape: f32[32,16], index: 1, kind: input, shape index: {}]
  %s2 = inlined_call_operand.vmem [shape: f32[16,48], index: 2, kind: input, shape index: {}]
  %s3 = inlined_call_operand.vmem [shape: f32[1,16], index: 3, kind: input, shape index: {}]
  %s4 = inlined_call_operand.vmem [shape: f32[16,48], index: 4, kind: input, shape index: {}]
  %s5 = inlined_call_operand.vmem [shape: f32[1,16], index: 5, kind: input, shape index: {}]
  %s6 = inlined_call_operand.vmem [shape: f32[1,16], index: 6, kind: input, shape index: {}]
  %s7 = inlined_call_operand.<no memory space> [shape: f32[1,1], index: 7, kind: input, shape index: {}]
  %s8 = inlined_call_operand.hbm [shape: f32[32,32], index: 8, kind: output, shape index: {}]
  %s9 = sld [smem:[#allocation0]]
  $region65: #{tpu_custom_call.1} parent=0
    _
  %s11 = ssub.s32 1, %s9
  %s12 = scalar_select 0, %s11, %s9
  %13 = sst [smem:[#allocation2]] %s7
  $region1: #{tpu_custom_call.1} parent=0
    #allocation3 [shape = 'u8[16384]{0}', space=vmem, size = 0x4000, scoped, tag = 'output window, operand 0']
    #allocation4 [shape = 's32[2]{0}', space=sflag, size = 0x8, scoped, tag = 'scoped memory for tpu_custom_call.1']
    %14 = vsyncpa [#allocation4], 0
    %s15 = scalar_lea.sflag [#allocation4], 1
    %16 = vsyncpa %s15, 0
    loop: start=0, step=1, limit=4
    $region2: #{tpu_custom_call.1} parent=1 // loop_pre_header
      _
    $region3: #{tpu_custom_call.1} parent=1 // loop_header
      %s18 = sphi 0, %s22
      %p19 = scmp.ge.s32.totalorder %s18, 4
      %s28 = sphi 0, %s30
      %s31 = sphi 0, %s28
      %s32 = sphi 0, %s31
      %s48 = sphi 0, %s32
      %s54 = sphi 0, %s56
      %s57 = sphi 0, %s54
      %s58 = sphi 0, %s57
      %s74 = sphi 0, %s58
      %s78 = sphi 0, %s78
      %s80 = sphi 0, %s78
      %s81 = sphi 0, %s80
      %s95 = sphi 0, %s81
      %s99 = sphi 0, %s99
      %s101 = sphi 0, %s99
      %s102 = sphi 0, %s101
      %s116 = sphi 0, %s102
      %s120 = sphi 0, %s120
      %s122 = sphi 0, %s120
      %s123 = sphi 0, %s122
      %s137 = sphi 0, %s123
      %s141 = sphi 0, %s141
      %s143 = sphi 0, %s141
      %s144 = sphi 0, %s143
      %s158 = sphi 0, %s144
      %s162 = sphi 0, %s162
      %s164 = sphi 0, %s162
      %s165 = sphi 0, %s164
      %s179 = sphi 0, %s165
      %s183 = sphi 0, %s183
      %s185 = sphi 0, %s183
      %s186 = sphi 0, %s185
      %s200 = sphi 0, %s186
      %s206 = sphi 0, %s208
      %s209 = sphi 0, %s206
      %s210 = sphi 0, %s209
      %s226 = sphi 0, %s210
    $region4: #{tpu_custom_call.1} parent=1 // loop_header_branch
      %21 = sbr.rel (%p19) target = $region8
    $region5: #{tpu_custom_call.1} parent=1 // loop_body
      %s23 = ssub.s32 %s18, 1
      %s24 = ssub.s32 %s18, 2
      %s25 = sadd.s32 %s18, 1
      %s26 = ssub.s32 %s18, %s25
      %p27 = scmp.eq.s32.totalorder %s26, 0
      %s29 = sadd.s32 %s28, 1
      %s30 = scalar_select %p27, %s28, %s29
      %p33 = pneg %p27
      %p34 = scmp.eq.s32.totalorder %s18, 1
      %p35 = por %p33, %p34
      %p36 = scmp.ne.s32.totalorder %s28, %s31
      %p37 = scmp.eq.s32.totalorder %s18, 0
      %p38 = por %p36, %p37
      %p39 = scmp.ne.s32.totalorder %s28, %s31
      %p40 = scmp.eq.s32.totalorder %s23, 1
      %p41 = por %p39, %p40
      %p42 = scmp.ne.s32.totalorder %s31, %s32
      %p43 = scmp.eq.s32.totalorder %s23, 0
      %p44 = por %p42, %p43
      %p45 = scmp.ne.s32.totalorder %s31, %s32
      %p46 = scmp.eq.s32.totalorder %s24, 1
      %p47 = por %p45, %p46
      %p49 = scmp.ne.s32.totalorder %s32, %s48
      %p50 = scmp.eq.s32.totalorder %s24, 0
      %p51 = por %p49, %p50
      %s52 = ssub.s32 %s18, %s25
      %p53 = scmp.eq.s32.totalorder %s52, 0
      %s55 = sadd.s32 %s54, 1
      %s56 = scalar_select %p53, %s54, %s55
      %p59 = pneg %p53
      %p60 = scmp.eq.s32.totalorder %s18, 1
      %p61 = por %p59, %p60
      %p62 = scmp.ne.s32.totalorder %s54, %s57
      %p63 = scmp.eq.s32.totalorder %s18, 0
      %p64 = por %p62, %p63
      %p65 = scmp.ne.s32.totalorder %s54, %s57
      %p66 = scmp.eq.s32.totalorder %s23, 1
      %p67 = por %p65, %p66
      %p68 = scmp.ne.s32.totalorder %s57, %s58
      %p69 = scmp.eq.s32.totalorder %s23, 0
      %p70 = por %p68, %p69
      %p71 = scmp.ne.s32.totalorder %s57, %s58
      %p72 = scmp.eq.s32.totalorder %s24, 1
      %p73 = por %p71, %p72
      %p75 = scmp.ne.s32.totalorder %s58, %s74
      %p76 = scmp.eq.s32.totalorder %s24, 0
      %p77 = por %p75, %p76
      %s79 = sadd.s32 %s78, 1
      %p82 = scmp.eq.s32.totalorder %s18, 1
      %p83 = scmp.ne.s32.totalorder %s78, %s80
      %p84 = scmp.eq.s32.totalorder %s18, 0
      %p85 = por %p83, %p84
      %p86 = scmp.ne.s32.totalorder %s78, %s80
      %p87 = scmp.eq.s32.totalorder %s23, 1
      %p88 = por %p86, %p87
      %p89 = scmp.ne.s32.totalorder %s80, %s81
      %p90 = scmp.eq.s32.totalorder %s23, 0
      %p91 = por %p89, %p90
      %p92 = scmp.ne.s32.totalorder %s80, %s81
      %p93 = scmp.eq.s32.totalorder %s24, 1
      %p94 = por %p92, %p93
      %p96 = scmp.ne.s32.totalorder %s81, %s95
      %p97 = scmp.eq.s32.totalorder %s24, 0
      %p98 = por %p96, %p97
      %s100 = sadd.s32 %s99, 1
      %p103 = scmp.eq.s32.totalorder %s18, 1
      %p104 = scmp.ne.s32.totalorder %s99, %s101
      %p105 = scmp.eq.s32.totalorder %s18, 0
      %p106 = por %p104, %p105
      %p107 = scmp.ne.s32.totalorder %s99, %s101
      %p108 = scmp.eq.s32.totalorder %s23, 1
      %p109 = por %p107, %p108
      %p110 = scmp.ne.s32.totalorder %s101, %s102
      %p111 = scmp.eq.s32.totalorder %s23, 0
      %p112 = por %p110, %p111
      %p113 = scmp.ne.s32.totalorder %s101, %s102
      %p114 = scmp.eq.s32.totalorder %s24, 1
      %p115 = por %p113, %p114
      %p117 = scmp.ne.s32.totalorder %s102, %s116
      %p118 = scmp.eq.s32.totalorder %s24, 0
      %p119 = por %p117, %p118
      %s121 = sadd.s32 %s120, 1
      %p124 = scmp.eq.s32.totalorder %s18, 1
      %p125 = scmp.ne.s32.totalorder %s120, %s122
      %p126 = scmp.eq.s32.totalorder %s18, 0
      %p127 = por %p125, %p126
      %p128 = scmp.ne.s32.totalorder %s120, %s122
      %p129 = scmp.eq.s32.totalorder %s23, 1
      %p130 = por %p128, %p129
      %p131 = scmp.ne.s32.totalorder %s122, %s123
      %p132 = scmp.eq.s32.totalorder %s23, 0
      %p133 = por %p131, %p132
      %p134 = scmp.ne.s32.totalorder %s122, %s123
      %p135 = scmp.eq.s32.totalorder %s24, 1
      %p136 = por %p134, %p135
      %p138 = scmp.ne.s32.totalorder %s123, %s137
      %p139 = scmp.eq.s32.totalorder %s24, 0
      %p140 = por %p138, %p139
      %s142 = sadd.s32 %s141, 1
      %p145 = scmp.eq.s32.totalorder %s18, 1
      %p146 = scmp.ne.s32.totalorder %s141, %s143
      %p147 = scmp.eq.s32.totalorder %s18, 0
      %p148 = por %p146, %p147
      %p149 = scmp.ne.s32.totalorder %s141, %s143
      %p150 = scmp.eq.s32.totalorder %s23, 1
      %p151 = por %p149, %p150
      %p152 = scmp.ne.s32.totalorder %s143, %s144
      %p153 = scmp.eq.s32.totalorder %s23, 0
      %p154 = por %p152, %p153
      %p155 = scmp.ne.s32.totalorder %s143, %s144
      %p156 = scmp.eq.s32.totalorder %s24, 1
      %p157 = por %p155, %p156
      %p159 = scmp.ne.s32.totalorder %s144, %s158
      %p160 = scmp.eq.s32.totalorder %s24, 0
      %p161 = por %p159, %p160
      %s163 = sadd.s32 %s162, 1
      %p166 = scmp.eq.s32.totalorder %s18, 1
      %p167 = scmp.ne.s32.totalorder %s162, %s164
      %p168 = scmp.eq.s32.totalorder %s18, 0
      %p169 = por %p167, %p168
      %p170 = scmp.ne.s32.totalorder %s162, %s164
      %p171 = scmp.eq.s32.totalorder %s23, 1
      %p172 = por %p170, %p171
      %p173 = scmp.ne.s32.totalorder %s164, %s165
      %p174 = scmp.eq.s32.totalorder %s23, 0
      %p175 = por %p173, %p174
      %p176 = scmp.ne.s32.totalorder %s164, %s165
      %p177 = scmp.eq.s32.totalorder %s24, 1
      %p178 = por %p176, %p177
      %p180 = scmp.ne.s32.totalorder %s165, %s179
      %p181 = scmp.eq.s32.totalorder %s24, 0
      %p182 = por %p180, %p181
      %s184 = sadd.s32 %s183, 1
      %p187 = scmp.eq.s32.totalorder %s18, 1
      %p188 = scmp.ne.s32.totalorder %s183, %s185
      %p189 = scmp.eq.s32.totalorder %s18, 0
      %p190 = por %p188, %p189
      %p191 = scmp.ne.s32.totalorder %s183, %s185
      %p192 = scmp.eq.s32.totalorder %s23, 1
      %p193 = por %p191, %p192
      %p194 = scmp.ne.s32.totalorder %s185, %s186
      %p195 = scmp.eq.s32.totalorder %s23, 0
      %p196 = por %p194, %p195
      %p197 = scmp.ne.s32.totalorder %s185, %s186
      %p198 = scmp.eq.s32.totalorder %s24, 1
      %p199 = por %p197, %p198
      %p201 = scmp.ne.s32.totalorder %s186, %s200
      %p202 = scmp.eq.s32.totalorder %s24, 0
      %p203 = por %p201, %p202
      %s204 = ssub.s32 %s18, %s25
      %p205 = scmp.eq.s32.totalorder %s204, 0
      %s207 = sadd.s32 %s206, 1
      %s208 = scalar_select %p205, %s206, %s207
      %p211 = pneg %p205
      %p212 = scmp.eq.s32.totalorder %s18, 1
      %p213 = por %p211, %p212
      %p214 = scmp.ne.s32.totalorder %s206, %s209
      %p215 = scmp.eq.s32.totalorder %s18, 0
      %p216 = por %p214, %p215
      %p217 = scmp.ne.s32.totalorder %s206, %s209
      %p218 = scmp.eq.s32.totalorder %s23, 1
      %p219 = por %p217, %p218
      %p220 = scmp.ne.s32.totalorder %s209, %s210
      %p221 = scmp.eq.s32.totalorder %s23, 0
      %p222 = por %p220, %p221
      %p223 = scmp.ne.s32.totalorder %s209, %s210
      %p224 = scmp.eq.s32.totalorder %s24, 1
      %p225 = por %p223, %p224
      %p227 = scmp.ne.s32.totalorder %s210, %s226
      %p228 = scmp.eq.s32.totalorder %s24, 0
      %p229 = por %p227, %p228
      %p230 = scmp.le.s32.totalorder 1, %s18
      %p231 = scmp.lt.s32.totalorder %s18, 3
      %p232 = pnand %p230, %p231
      %p233 = pneg %p232
      // Predicated region
      $region9: #{tpu_custom_call.1} parent=5 // pred_check
        _
      $region10: #{tpu_custom_call.1} parent=5 // pred_check_branch
        %235 = sbr.rel (%p232) target = $region12
      $region11: #{tpu_custom_call.1} parent=5 // pred_region
        %s236 = ssub.s32 %s18, 1
        // Predicated region
        $region13: #{tpu_custom_call.1} parent=11 // pred_check
          %p237 = pneg %p91
        $region14: #{tpu_custom_call.1} parent=11 // pred_check_branch
          %239 = sbr.rel (%p237) target = $region16
        $region15: #{tpu_custom_call.1} parent=11 // pred_region
          _
        $region16: #{tpu_custom_call.1} parent=11 // pred_fallthru
          _
        // Predicated region
        $region17: #{tpu_custom_call.1} parent=11 // pred_check
          %p240 = pneg %p112
        $region18: #{tpu_custom_call.1} parent=11 // pred_check_branch
          %242 = sbr.rel (%p240) target = $region20
        $region19: #{tpu_custom_call.1} parent=11 // pred_region
          _
        $region20: #{tpu_custom_call.1} parent=11 // pred_fallthru
          _
        // Predicated region
        $region21: #{tpu_custom_call.1} parent=11 // pred_check
          %p243 = pneg %p133
        $region22: #{tpu_custom_call.1} parent=11 // pred_check_branch
          %245 = sbr.rel (%p243) target = $region24
        $region23: #{tpu_custom_call.1} parent=11 // pred_region
          _
        $region24: #{tpu_custom_call.1} parent=11 // pred_fallthru
          _
        // Predicated region
        $region25: #{tpu_custom_call.1} parent=11 // pred_check
          %p246 = pneg %p154
        $region26: #{tpu_custom_call.1} parent=11 // pred_check_branch
          %248 = sbr.rel (%p246) target = $region28
        $region27: #{tpu_custom_call.1} parent=11 // pred_region
          _
        $region28: #{tpu_custom_call.1} parent=11 // pred_fallthru
          _
        // Predicated region
        $region29: #{tpu_custom_call.1} parent=11 // pred_check
          %p249 = pneg %p175
        $region30: #{tpu_custom_call.1} parent=11 // pred_check_branch
          %251 = sbr.rel (%p249) target = $region32
        $region31: #{tpu_custom_call.1} parent=11 // pred_region
          _
        $region32: #{tpu_custom_call.1} parent=11 // pred_fallthru
          _
        // Predicated region
        $region33: #{tpu_custom_call.1} parent=11 // pred_check
          %p252 = pneg %p196
        $region34: #{tpu_custom_call.1} parent=11 // pred_check_branch
          %254 = sbr.rel (%p252) target = $region36
        $region35: #{tpu_custom_call.1} parent=11 // pred_region
          _
        $region36: #{tpu_custom_call.1} parent=11 // pred_fallthru
          _
      $region12: #{tpu_custom_call.1} parent=5 // pred_fallthru
        _
      %p255 = scmp.lt.s32.totalorder %s18, 2
      // Predicated region
      $region37: #{tpu_custom_call.1} parent=5 // pred_check
        %p256 = pneg %p255
      $region38: #{tpu_custom_call.1} parent=5 // pred_check_branch
        %258 = sbr.rel (%p256) target = $region40
      $region39: #{tpu_custom_call.1} parent=5 // pred_region
        // Predicated region
        $region41: #{tpu_custom_call.1} parent=39 // pred_check
          %p259 = pneg %p38
        $region42: #{tpu_custom_call.1} parent=39 // pred_check_branch
          %261 = sbr.rel (%p259) target = $region44
        $region43: #{tpu_custom_call.1} parent=39 // pred_region
          %s262 = smul.u32 2, %s18
          %p263 = scmp.lt.s32.totalorder %s262, 3
          %s264 = scalar_select %p263, %s262, 3
          %s265 = smul.addr %s264, 8
          %s266 = scalar_lea.vmem %s0, %s265
          %s267 = smul.u32 2, %s18
        $region44: #{tpu_custom_call.1} parent=39 // pred_fallthru
          _
        // Predicated region
        $region45: #{tpu_custom_call.1} parent=39 // pred_check
          %p268 = pneg %p64
        $region46: #{tpu_custom_call.1} parent=39 // pred_check_branch
          %270 = sbr.rel (%p268) target = $region48
        $region47: #{tpu_custom_call.1} parent=39 // pred_region
          %s271 = smul.u32 2, %s18
          %p272 = scmp.lt.s32.totalorder %s271, 3
          %s273 = scalar_select %p272, %s271, 3
          %s274 = smul.addr %s273, 8
          %s275 = scalar_lea.vmem %s1, %s274
          %s276 = smul.u32 2, %s18
        $region48: #{tpu_custom_call.1} parent=39 // pred_fallthru
          _
      $region40: #{tpu_custom_call.1} parent=5 // pred_fallthru
        _
      %p277 = scmp.le.s32.totalorder 1, %s18
      %p278 = scmp.lt.s32.totalorder %s18, 3
      %p279 = pnand %p277, %p278
      %p280 = pneg %p279
      // Predicated region
      $region49: #{tpu_custom_call.1} parent=5 // pred_check
        _
      $region50: #{tpu_custom_call.1} parent=5 // pred_check_branch
        %282 = sbr.rel (%p279) target = $region52
      $region51: #{tpu_custom_call.1} parent=5 // pred_region
        %s283 = ssub.s32 %s18, 1
        %s284 = smul.u32 2, %s23
        %p285 = scmp.lt.s32.totalorder %s284, 3
        %s286 = scalar_select %p285, %s284, 3
        %s287 = smul.addr %s286, 8
        %s288 = scalar_lea.vmem %s0, %s287
        %p289 = pneg %p44
        %p290 = pneg %p41
        %s291 = smul.u32 2, %s23
        %p292 = scmp.lt.s32.totalorder %s291, 3
        %s293 = scalar_select %p292, %s291, 3
        %s294 = smul.addr %s293, 8
        %s295 = scalar_lea.vmem %s1, %s294
        %p296 = pneg %p70
        %p297 = pneg %p67
        %p298 = pneg %p91
        %p299 = pneg %p88
        %p300 = pneg %p112
        %p301 = pneg %p109
        %p302 = pneg %p133
        %p303 = pneg %p130
        %p304 = pneg %p154
        %p305 = pneg %p151
        %p306 = pneg %p175
        %p307 = pneg %p172
        %p308 = pneg %p196
        %p309 = pneg %p193
        %p310 = pneg %p222
        %p311 = pneg %p219
        %s312 = sand.u32 %s209, 1
        %s313 = scalar_lea.sflag [#allocation4], %s312
        %s314 = sand.u32 %s209, 1
        %s315 = smul.addr %s314, 16
        %s316 = scalar_lea.vmem [#allocation3], %s315
        %s317 = smul.u32 2, %s23
        %p318 = scmp.lt.s32.totalorder %s317, 3
        %s319 = scalar_select %p318, %s317, 3
        %s320 = smul.addr %s319, 8
        %s321 = scalar_lea.vmem %s0, %s320
        %s322 = smul.u32 2, %s23
        %s323 = smul.u32 2, %s23
        %p324 = scmp.lt.s32.totalorder %s323, 3
        %s325 = scalar_select %p324, %s323, 3
        %s326 = smul.addr %s325, 8
        %s327 = scalar_lea.vmem %s1, %s326
        %s328 = smul.u32 2, %s23
        %s329 = smul.u32 2, %s23
        %v330 = vld [vmem:[%s321] sm:$0xff]
        %v331 = vld [vmem:[%s321 + $0x8] sm:$0xff]
        %v332 = vld [vmem:[%s327] sm:$0xff]
        %v333 = vld [vmem:[%s327 + $0x8] sm:$0xff]
        %v334 = vlaneseq
        %v335 = vshrl.u32 %v334, 7
        %v336 = vadd.s32 %v335, 8
        %vm337 = vcmp.lt.s32.totalorder %v335, 0
        %v338 = vsub.s32 0, %v335
        %v339 = vsel %vm337, %v338, %v335
        %v340 = vshrl.u32 %v339, 4
        %v341 = vand.u32 %v339, 15
        %v342 = vsub.s32 0, %v341
        %v343 = vsel %vm337, %v342, %v341
        %vm344 = vcmp.lt.s32.totalorder %v336, 0
        %v345 = vsub.s32 0, %v336
        %v346 = vsel %vm344, %v345, %v336
        %v347 = vshrl.u32 %v346, 4
        %v348 = vand.u32 %v346, 15
        %v349 = vsub.s32 0, %v348
        %v350 = vsel %vm344, %v349, %v348
        %vm351 = vcmp.ne.s32.totalorder %v343, 0
        %vm352 = vcmp.ne.s32.totalorder %v350, 0
        %vm353 = vcmp.lt.s32.totalorder %v343, 0
        %vm354 = vcmp.lt.s32.totalorder %v350, 0
        %vm355 = vmand %vm353, %vm351
        %vm356 = vmand %vm354, %vm352
        %v357 = vadd.s32 %v343, 16
        %v358 = vadd.s32 %v350, 16
        %v359 = vsel %vm355, %v357, %v343
        %v360 = vsel %vm356, %v358, %v350
        %vm361 = vcmp.ne.s32.totalorder %v359, 0
        %vm362 = vcmp.ne.s32.totalorder %v360, 0
        %v363 = vsel %vm361, 1, 0
        %v364 = vsel %vm362, 1, 0
        %v365 = vcvt.s32.f32 %v363
        %v366 = vcvt.s32.f32 %v364
        %vm367 = vcmp.ne.s32.totalorder %v359, 15
        %vm368 = vcmp.ne.s32.totalorder %v360, 15
        %v369 = vsel %vm367, 1, 0
        %v370 = vsel %vm368, 1, 0
        %v371 = vcvt.s32.f32 %v369
        %v372 = vcvt.s32.f32 %v370
        %v373 = vld [vmem:[%s2] sm:$0xff]
        %v374 = vld [vmem:[%s2 + $0x8] sm:$0xff]
        %v375 = vld [vmem:[%s3] sm:$0x1]
        %vm376 = vcmask 130048
        %v378 = vsel %vm376, %v330, 0
        %v381 = vsel %vm376, %v331, 0
        %383 = vmatprep.subr.mxu0 0.0
        %384 = vmatpush1.msra.mxu0 %v373
        %385 = vmatprep.subr.mxu0 0.0
        %386 = vmatpush1.msra.mxu0 %v374
        %387 = vmatprep.subr.mxu0 0.0
        %388 = vmatpush1.msra.mxu0 0.0
        %389 = vmatprep.subr.mxu0 0.0
        %390 = vmatpush1.msra.mxu0 0.0
        %391 = vmatprep.subr.mxu0 0.0
        %392 = vmatpush1.msra.mxu0 0.0
        %393 = vmatprep.subr.mxu0 0.0
        %394 = vmatpush1.msra.mxu0 0.0
        %395 = vmatprep.subr.mxu0 0.0
        %396 = vmatpush1.msra.mxu0 0.0
        %397 = vmatprep.subr.mxu0 0.0
        %398 = vmatpush1.msra.mxu0 0.0
        %399 = vmatprep.subr.mxu0 0.0
        %400 = vmatpush1.msra.mxu0 0.0
        %401 = vmatprep.subr.mxu0 0.0
        %402 = vmatpush1.msra.mxu0 0.0
        %403 = vmatprep.subr.mxu0 0.0
        %404 = vmatpush1.msra.mxu0 0.0
        %405 = vmatprep.subr.mxu0 0.0
        %406 = vmatpush1.msra.mxu0 0.0
        %407 = vmatprep.subr.mxu0 0.0
        %408 = vmatpush1.msra.mxu0 0.0
        %409 = vmatprep.subr.mxu0 0.0
        %410 = vmatpush1.msra.mxu0 0.0
        %411 = vmatprep.subr.mxu0 0.0
        %412 = vmatpush1.msra.mxu0 0.0
        %413 = vmatprep.subr.mxu0 0.0
        %414 = vmatpush1.msra.mxu0 0.0
        %415 = vmatprep.subr.mxu0 0.0
        %416 = vmatpush1.msra.mxu0 0.0
        %417 = vmatprep.subr.mxu0 0.0
        %418 = vmatpush1.msra.mxu0 0.0
        %419 = vmatprep.subr.mxu0 0.0
        %420 = vmatpush1.msra.mxu0 0.0
        %421 = vmatprep.subr.mxu0 0.0
        %422 = vmatpush1.msra.mxu0 0.0
        %423 = vmatprep.subr.mxu0 0.0
        %424 = vmatpush1.msra.mxu0 0.0
        %425 = vmatprep.subr.mxu0 0.0
        %426 = vmatpush1.msra.mxu0 0.0
        %427 = vmatprep.subr.mxu0 0.0
        %428 = vmatpush1.msra.mxu0 0.0
        %429 = vmatprep.subr.mxu0 0.0
        %430 = vmatpush1.msra.mxu0 0.0
        %431 = vmatprep.subr.mxu0 0.0
        %432 = vmatpush1.msra.mxu0 0.0
        %433 = vmatprep.subr.mxu0 0.0
        %434 = vmatpush1.msra.mxu0 0.0
        %435 = vmatprep.subr.mxu0 0.0
        %436 = vmatpush1.msra.mxu0 0.0
        %437 = vmatprep.subr.mxu0 0.0
        %438 = vmatpush1.msra.mxu0 0.0
        %439 = vmatprep.subr.mxu0 0.0
        %440 = vmatpush1.msra.mxu0 0.0
        %441 = vmatprep.subr.mxu0 0.0
        %442 = vmatpush1.msra.mxu0 0.0
        %443 = vmatprep.subr.mxu0 0.0
        %444 = vmatpush1.msra.mxu0 0.0
        %445 = vmatprep.subr.mxu0 0.0
        %446 = vmatpush1.msra.mxu0 0.0
        %447 = vmatprep.mubr.f32.mxu0 0.0
        %448 = vmatmul.mubr.f32.gmra.mrb[0].mxu0 %v378
        %v449 = vpop.f32.mrb[0].mxu0
        %v450 = vadd.f32 0.0, %v449
        %v451 = vpop.f32.mrb[0].mxu0
        %452 = vmatprep.mubr.f32.mxu0 0.0
        %453 = vmatmul.mubr.f32.gmra.mrb[0].mxu0 %v381
        %v454 = vpop.f32.mrb[0].mxu0
        %v455 = vadd.f32 0.0, %v454
        %v456 = vpop.f32.mrb[0].mxu0
        %457 = vdwg.mxu0
        %v458 = vrot.slane %v450, 7
        %v459 = vrot.slane %v455, 7
        %vm460 = vcmp.lt.s32.totalorder %v335, 1
        %v461 = vsel %vm460, %v458, %v459
        %v462 = vsel %vm460, %v459, %v458
        %v463 = vmul.f32 %v462, %v365
        %v464 = vmul.f32 %v461, %v366
        %467 = vrot.lane.b32.xlu0 %v450, 96
        %v468 = vpop.permute.xlu0 %467
        %469 = vrot.lane.b32.xlu0 %v455, 96
        %v470 = vpop.permute.xlu0 %469
        %v473 = vrot.slane %v468, 1
        %v474 = vrot.slane %v470, 1
        %vm475 = vcmp.lt.s32.totalorder %v335, 7
        %v476 = vsel %vm475, %v473, %v474
        %v477 = vsel %vm475, %v474, %v473
        %v478 = vmul.f32 %v476, %v371
        %v479 = vmul.f32 %v477, %v372
        %480 = vrot.lane.b32.xlu0 %v450, 112
        %v481 = vpop.permute.xlu0 %480
        %482 = vrot.lane.b32.xlu0 %v455, 112
        %v483 = vpop.permute.xlu0 %482
        %v486 = vadd.f32 %v463, %v481
        %v487 = vadd.f32 %v464, %v483
        %v488 = vadd.f32 %v486, %v478
        %v489 = vadd.f32 %v487, %v479
        %v491 = vlaneseq
        %v492 = vshrl.u32 %v491, 7
        %v493 = vsub.s32 0, %v492
        %v494 = vrot.slane %v375, %v493
        %v496 = vadd.f32 %v488, %v494
        %v497 = vadd.f32 %v489, %v494
        %v498 = vtanh.pop %v496
        %v499 = vtanh.pop %v497
        %v500 = vld [vmem:[%s4] sm:$0xff]
        %v501 = vld [vmem:[%s4 + $0x8] sm:$0xff]
        %v502 = vld [vmem:[%s5] sm:$0x1]
        %v504 = vsel %vm376, %v332, 0
        %v507 = vsel %vm376, %v333, 0
        %509 = vmatprep.subr.mxu0 0.0
        %510 = vmatpush1.msra.mxu0 %v500
        %511 = vmatprep.subr.mxu0 0.0
        %512 = vmatpush1.msra.mxu0 %v501
        %513 = vmatprep.subr.mxu0 0.0
        %514 = vmatpush1.msra.mxu0 0.0
        %515 = vmatprep.subr.mxu0 0.0
        %516 = vmatpush1.msra.mxu0 0.0
        %517 = vmatprep.subr.mxu0 0.0
        %518 = vmatpush1.msra.mxu0 0.0
        %519 = vmatprep.subr.mxu0 0.0
        %520 = vmatpush1.msra.mxu0 0.0
        %521 = vmatprep.subr.mxu0 0.0
        %522 = vmatpush1.msra.mxu0 0.0
        %523 = vmatprep.subr.mxu0 0.0
        %524 = vmatpush1.msra.mxu0 0.0
        %525 = vmatprep.subr.mxu0 0.0
        %526 = vmatpush1.msra.mxu0 0.0
        %527 = vmatprep.subr.mxu0 0.0
        %528 = vmatpush1.msra.mxu0 0.0
        %529 = vmatprep.subr.mxu0 0.0
        %530 = vmatpush1.msra.mxu0 0.0
        %531 = vmatprep.subr.mxu0 0.0
        %532 = vmatpush1.msra.mxu0 0.0
        %533 = vmatprep.subr.mxu0 0.0
        %534 = vmatpush1.msra.mxu0 0.0
        %535 = vmatprep.subr.mxu0 0.0
        %536 = vmatpush1.msra.mxu0 0.0
        %537 = vmatprep.subr.mxu0 0.0
        %538 = vmatpush1.msra.mxu0 0.0
        %539 = vmatprep.subr.mxu0 0.0
        %540 = vmatpush1.msra.mxu0 0.0
        %541 = vmatprep.subr.mxu0 0.0
        %542 = vmatpush1.msra.mxu0 0.0
        %543 = vmatprep.subr.mxu0 0.0
        %544 = vmatpush1.msra.mxu0 0.0
        %545 = vmatprep.subr.mxu0 0.0
        %546 = vmatpush1.msra.mxu0 0.0
        %547 = vmatprep.subr.mxu0 0.0
        %548 = vmatpush1.msra.mxu0 0.0
        %549 = vmatprep.subr.mxu0 0.0
        %550 = vmatpush1.msra.mxu0 0.0
        %551 = vmatprep.subr.mxu0 0.0
        %552 = vmatpush1.msra.mxu0 0.0
        %553 = vmatprep.subr.mxu0 0.0
        %554 = vmatpush1.msra.mxu0 0.0
        %555 = vmatprep.subr.mxu0 0.0
        %556 = vmatpush1.msra.mxu0 0.0
        %557 = vmatprep.subr.mxu0 0.0
        %558 = vmatpush1.msra.mxu0 0.0
        %559 = vmatprep.subr.mxu0 0.0
        %560 = vmatpush1.msra.mxu0 0.0
        %561 = vmatprep.subr.mxu0 0.0
        %562 = vmatpush1.msra.mxu0 0.0
        %563 = vmatprep.subr.mxu0 0.0
        %564 = vmatpush1.msra.mxu0 0.0
        %565 = vmatprep.subr.mxu0 0.0
        %566 = vmatpush1.msra.mxu0 0.0
        %567 = vmatprep.subr.mxu0 0.0
        %568 = vmatpush1.msra.mxu0 0.0
        %569 = vmatprep.subr.mxu0 0.0
        %570 = vmatpush1.msra.mxu0 0.0
        %571 = vmatprep.subr.mxu0 0.0
        %572 = vmatpush1.msra.mxu0 0.0
        %573 = vmatprep.mubr.f32.mxu0 0.0
        %574 = vmatmul.mubr.f32.gmra.mrb[0].mxu0 %v504
        %v575 = vpop.f32.mrb[0].mxu0
        %v576 = vadd.f32 0.0, %v575
        %v577 = vpop.f32.mrb[0].mxu0
        %578 = vmatprep.mubr.f32.mxu0 0.0
        %579 = vmatmul.mubr.f32.gmra.mrb[0].mxu0 %v507
        %v580 = vpop.f32.mrb[0].mxu0
        %v581 = vadd.f32 0.0, %v580
        %v582 = vpop.f32.mrb[0].mxu0
        %583 = vdwg.mxu0
        %v584 = vrot.slane %v576, 7
        %v585 = vrot.slane %v581, 7
        %v586 = vsel %vm460, %v584, %v585
        %v587 = vsel %vm460, %v585, %v584
        %v588 = vmul.f32 %v587, %v365
        %v589 = vmul.f32 %v586, %v366
        %592 = vrot.lane.b32.xlu0 %v576, 96
        %v593 = vpop.permute.xlu0 %592
        %594 = vrot.lane.b32.xlu0 %v581, 96
        %v595 = vpop.permute.xlu0 %594
        %v598 = vrot.slane %v593, 1
        %v599 = vrot.slane %v595, 1
        %v600 = vsel %vm475, %v598, %v599
        %v601 = vsel %vm475, %v599, %v598
        %v602 = vmul.f32 %v600, %v371
        %v603 = vmul.f32 %v601, %v372
        %604 = vrot.lane.b32.xlu0 %v576, 112
        %v605 = vpop.permute.xlu0 %604
        %606 = vrot.lane.b32.xlu0 %v581, 112
        %v607 = vpop.permute.xlu0 %606
        %v610 = vadd.f32 %v588, %v605
        %v611 = vadd.f32 %v589, %v607
        %v612 = vadd.f32 %v610, %v602
        %v613 = vadd.f32 %v611, %v603
        %v615 = vlaneseq
        %v616 = vshrl.u32 %v615, 7
        %v617 = vsub.s32 0, %v616
        %v618 = vrot.slane %v502, %v617
        %v620 = vadd.f32 %v612, %v618
        %v621 = vadd.f32 %v613, %v618
        %v622 = vtanh.pop %v620
        %v623 = vtanh.pop %v621
        %v624 = vadd.f32 %v498, %v622
        %v625 = vadd.f32 %v499, %v623
        %v626 = vld [vmem:[%s6] sm:$0x1]
        %s627 = sld [smem:[#allocation2]]
        %v628 = vstv %s627
        %v630 = vsel %vm376, %v626, 0
        %632 = vmatprep.subr.mxu0 0.0
        %633 = vmatpush1.msra.mxu0 %v624
        %634 = vmatprep.subr.mxu0 0.0
        %635 = vmatpush1.msra.mxu0 %v625
        %636 = vmatprep.subr.mxu0 0.0
        %637 = vmatpush1.msra.mxu0 0.0
        %638 = vmatprep.subr.mxu0 0.0
        %639 = vmatpush1.msra.mxu0 0.0
        %640 = vmatprep.subr.mxu0 0.0
        %641 = vmatpush1.msra.mxu0 0.0
        %642 = vmatprep.subr.mxu0 0.0
        %643 = vmatpush1.msra.mxu0 0.0
        %644 = vmatprep.subr.mxu0 0.0
        %645 = vmatpush1.msra.mxu0 0.0
        %646 = vmatprep.subr.mxu0 0.0
        %647 = vmatpush1.msra.mxu0 0.0
        %648 = vmatprep.subr.mxu0 0.0
        %649 = vmatpush1.msra.mxu0 0.0
        %650 = vmatprep.subr.mxu0 0.0
        %651 = vmatpush1.msra.mxu0 0.0
        %652 = vmatprep.subr.mxu0 0.0
        %653 = vmatpush1.msra.mxu0 0.0
        %654 = vmatprep.subr.mxu0 0.0
        %655 = vmatpush1.msra.mxu0 0.0
        %656 = vmatprep.subr.mxu0 0.0
        %657 = vmatpush1.msra.mxu0 0.0
        %658 = vmatprep.subr.mxu0 0.0
        %659 = vmatpush1.msra.mxu0 0.0
        %660 = vmatprep.subr.mxu0 0.0
        %661 = vmatpush1.msra.mxu0 0.0
        %662 = vmatprep.subr.mxu0 0.0
        %663 = vmatpush1.msra.mxu0 0.0
        %664 = vmatprep.subr.mxu0 0.0
        %665 = vmatpush1.msra.mxu0 0.0
        %666 = vmatprep.subr.mxu0 0.0
        %667 = vmatpush1.msra.mxu0 0.0
        %668 = vmatprep.subr.mxu0 0.0
        %669 = vmatpush1.msra.mxu0 0.0
        %670 = vmatprep.subr.mxu0 0.0
        %671 = vmatpush1.msra.mxu0 0.0
        %672 = vmatprep.subr.mxu0 0.0
        %673 = vmatpush1.msra.mxu0 0.0
        %674 = vmatprep.subr.mxu0 0.0
        %675 = vmatpush1.msra.mxu0 0.0
        %676 = vmatprep.subr.mxu0 0.0
        %677 = vmatpush1.msra.mxu0 0.0
        %678 = vmatprep.subr.mxu0 0.0
        %679 = vmatpush1.msra.mxu0 0.0
        %680 = vmatprep.subr.mxu0 0.0
        %681 = vmatpush1.msra.mxu0 0.0
        %682 = vmatprep.subr.mxu0 0.0
        %683 = vmatpush1.msra.mxu0 0.0
        %684 = vmatprep.subr.mxu0 0.0
        %685 = vmatpush1.msra.mxu0 0.0
        %686 = vmatprep.subr.mxu0 0.0
        %687 = vmatpush1.msra.mxu0 0.0
        %688 = vmatprep.subr.mxu0 0.0
        %689 = vmatpush1.msra.mxu0 0.0
        %690 = vmatprep.subr.mxu0 0.0
        %691 = vmatpush1.msra.mxu0 0.0
        %692 = vmatprep.subr.mxu0 0.0
        %693 = vmatpush1.msra.mxu0 0.0
        %694 = vmatprep.subr.mxu0 0.0
        %695 = vmatpush1.msra.mxu0 0.0
        %696 = vmatprep.mubr.f32.mxu0 0.0
        %697 = vmatmul.mubr.f32.gmra.mrb[0].mxu0 %v630
        %v698 = vpop.f32.mrb[0].mxu0
        %v699 = vadd.f32 %v628, %v698
        %v700 = vpop.f32.mrb[0].mxu0
        %701 = vdwg.mxu0
        %v702 = vxor.u32 %v699, 2147483648
        %v703 = vmul.f32 %v702, 1.442695
        %v704 = vpow.pop %v703
        %v705 = vadd.f32 %v704, 1.0
        %v706 = vrcp.pop %v705
        %v707 = vmul.f32 1.0, %v706
        %v708 = vlaneseq
        %v709 = vand.u32 %v708, 127
        %v710 = vmul.u32 %v709, 16
        %vm711 = vcmp.ge.s32.totalorder %v335, %v710
        %vm712 = vcmp.ge.s32.totalorder %v336, %v710
        %v713 = vadd.s32 %v710, 16
        %vm714 = vcmp.lt.s32.totalorder %v335, %v713
        %vm715 = vcmp.lt.s32.totalorder %v336, %v713
        %vm716 = vmand %vm711, %vm714
        %vm717 = vmand %vm712, %vm715
        %v718 = vsel %vm716, 1, 0
        %v719 = vsel %vm717, 1, 0
        %v720 = vcvt.s32.f32 %v718
        %v721 = vcvt.s32.f32 %v719
        %vm722 = vcmask 7168
        %v724 = vsel %vm722, %v720, 0
        %v727 = vsel %vm722, %v721, 0
        %vm729 = vcmask 1040384
        %v731 = vsel %vm729, %v707, 0
        %733 = vmatprep.subr.mxu0 0.0
        %734 = vmatpush1.msra.mxu0 %v731
        %735 = vmatprep.subr.mxu0 0.0
        %736 = vmatpush1.msra.mxu0 0.0
        %737 = vmatprep.subr.mxu0 0.0
        %738 = vmatpush1.msra.mxu0 0.0
        %739 = vmatprep.subr.mxu0 0.0
        %740 = vmatpush1.msra.mxu0 0.0
        %741 = vmatprep.subr.mxu0 0.0
        %742 = vmatpush1.msra.mxu0 0.0
        %743 = vmatprep.subr.mxu0 0.0
        %744 = vmatpush1.msra.mxu0 0.0
        %745 = vmatprep.subr.mxu0 0.0
        %746 = vmatpush1.msra.mxu0 0.0
        %747 = vmatprep.subr.mxu0 0.0
        %748 = vmatpush1.msra.mxu0 0.0
        %749 = vmatprep.subr.mxu0 0.0
        %750 = vmatpush1.msra.mxu0 0.0
        %751 = vmatprep.subr.mxu0 0.0
        %752 = vmatpush1.msra.mxu0 0.0
        %753 = vmatprep.subr.mxu0 0.0
        %754 = vmatpush1.msra.mxu0 0.0
        %755 = vmatprep.subr.mxu0 0.0
        %756 = vmatpush1.msra.mxu0 0.0
        %757 = vmatprep.subr.mxu0 0.0
        %758 = vmatpush1.msra.mxu0 0.0
        %759 = vmatprep.subr.mxu0 0.0
        %760 = vmatpush1.msra.mxu0 0.0
        %761 = vmatprep.subr.mxu0 0.0
        %762 = vmatpush1.msra.mxu0 0.0
        %763 = vmatprep.subr.mxu0 0.0
        %764 = vmatpush1.msra.mxu0 0.0
        %765 = vmatprep.subr.mxu0 0.0
        %766 = vmatpush1.msra.mxu0 0.0
        %767 = vmatprep.subr.mxu0 0.0
        %768 = vmatpush1.msra.mxu0 0.0
        %769 = vmatprep.subr.mxu0 0.0
        %770 = vmatpush1.msra.mxu0 0.0
        %771 = vmatprep.subr.mxu0 0.0
        %772 = vmatpush1.msra.mxu0 0.0
        %773 = vmatprep.subr.mxu0 0.0
        %774 = vmatpush1.msra.mxu0 0.0
        %775 = vmatprep.subr.mxu0 0.0
        %776 = vmatpush1.msra.mxu0 0.0
        %777 = vmatprep.subr.mxu0 0.0
        %778 = vmatpush1.msra.mxu0 0.0
        %779 = vmatprep.subr.mxu0 0.0
        %780 = vmatpush1.msra.mxu0 0.0
        %781 = vmatprep.subr.mxu0 0.0
        %782 = vmatpush1.msra.mxu0 0.0
        %783 = vmatprep.subr.mxu0 0.0
        %784 = vmatpush1.msra.mxu0 0.0
        %785 = vmatprep.subr.mxu0 0.0
        %786 = vmatpush1.msra.mxu0 0.0
        %787 = vmatprep.subr.mxu0 0.0
        %788 = vmatpush1.msra.mxu0 0.0
        %789 = vmatprep.subr.mxu0 0.0
        %790 = vmatpush1.msra.mxu0 0.0
        %791 = vmatprep.subr.mxu0 0.0
        %792 = vmatpush1.msra.mxu0 0.0
        %793 = vmatprep.subr.mxu0 0.0
        %794 = vmatpush1.msra.mxu0 0.0
        %795 = vmatprep.subr.mxu0 0.0
        %796 = vmatpush1.msra.mxu0 0.0
        %797 = vmatprep.mubr.f32.mxu0 0.0
        %798 = vmatmul.mubr.f32.gmra.mrb[0].mxu0 %v724
        %v799 = vpop.f32.mrb[0].mxu0
        %v800 = vadd.f32 0.0, %v799
        %v801 = vpop.f32.mrb[0].mxu0
        %802 = vmatprep.mubr.f32.mxu0 0.0
        %803 = vmatmul.mubr.f32.gmra.mrb[0].mxu0 %v727
        %v804 = vpop.f32.mrb[0].mxu0
        %v805 = vadd.f32 0.0, %v804
        %v806 = vpop.f32.mrb[0].mxu0
        %807 = vdwg.mxu0
        %v808 = vmul.f32 %v800, %v330
        %v809 = vmul.f32 %v805, %v331
        %810 = vst.msk [vmem:[%s316] sm:$0xff] %vm376, %v808
        %811 = vst.msk [vmem:[%s316 + $0x8] sm:$0xff] %vm376, %v809
        %v812 = vmul.f32 %v800, %v332
        %v813 = vmul.f32 %v805, %v333
        %v814 = vsub.f32 %v332, %v812
        %v815 = vsub.f32 %v333, %v813
        %818 = vrot.lane.b32.xlu0 %v814, 16
        %v819 = vpop.permute.xlu0 %818
        %820 = vrot.lane.b32.xlu0 %v815, 16
        %v821 = vpop.permute.xlu0 %820
        %vm824 = vcmask 261248
        %825 = vst.msk [vmem:[%s316] sm:$0xff] %vm824, %v819
        %826 = vst.msk [vmem:[%s316 + $0x8] sm:$0xff] %vm824, %v821
        %s827 = sand.u32 %s209, 1
        %s828 = scalar_lea.sflag [#allocation4], %s827
        %s829 = sand.u32 %s209, 1
        %s830 = smul.addr %s829, 16
        %s831 = scalar_lea.vmem [#allocation3], %s830
        // Predicated region
        $region53: #{tpu_custom_call.1} parent=51 // pred_check
          %p832 = pneg %p219
        $region54: #{tpu_custom_call.1} parent=51 // pred_check_branch
          %834 = sbr.rel (%p832) target = $region56
        $region55: #{tpu_custom_call.1} parent=51 // pred_region
          %s835 = smul.u32 2, %s23
          %s837 = ssub.s32 256, 256
          %838 = vsyncadd %s828, %s837
          %s839 = smul.addr %s835, 128
          %s840 = scalar_lea.hbm %s8, %s839
          %s841 = sshll.u32 %s831, 4
          %s842 = int_to_ptr.vmem [resolvable:$true] %s841
          %847 = dma.vmem_to_hbm [thread:$0]  %s842, 256, %s840, %s828, 128, 128, 8
        $region56: #{tpu_custom_call.1} parent=51 // pred_fallthru
          _
      $region52: #{tpu_custom_call.1} parent=5 // pred_fallthru
        _
      %p848 = scmp.le.s32.totalorder 2, %s18
      // Predicated region
      $region57: #{tpu_custom_call.1} parent=5 // pred_check
        %p849 = pneg %p848
      $region58: #{tpu_custom_call.1} parent=5 // pred_check_branch
        %851 = sbr.rel (%p849) target = $region60
      $region59: #{tpu_custom_call.1} parent=5 // pred_region
        %s852 = ssub.s32 %s18, 2
        // Predicated region
        $region61: #{tpu_custom_call.1} parent=59 // pred_check
          %p853 = pneg %p225
        $region62: #{tpu_custom_call.1} parent=59 // pred_check_branch
          %855 = sbr.rel (%p853) target = $region64
        $region63: #{tpu_custom_call.1} parent=59 // pred_region
          %s856 = sand.u32 %s210, 1
          %s857 = scalar_lea.sflag [#allocation4], %s856
          %s858 = sand.u32 %s210, 1
          %s859 = smul.addr %s858, 16
          %s860 = scalar_lea.vmem [#allocation3], %s859
          %861 = dma.done %s857, 256
        $region64: #{tpu_custom_call.1} parent=59 // pred_fallthru
          _
      $region60: #{tpu_custom_call.1} parent=5 // pred_fallthru
        _
    $region6: #{tpu_custom_call.1} parent=1 // loop_footer
      %s22 = sadd.s32 1, %s18
    $region7: #{tpu_custom_call.1} parent=1 // loop_footer_branch
      %17 = sbr.rel target = $region3
    $region8: #{tpu_custom_call.1} parent=1 // loop_exit
      _
    %862 = vsyncpa [#allocation4], 1
    %s863 = scalar_lea.sflag [#allocation4], 1
    %864 = vsyncpa %s863, 1

// kernel: tpu_custom_call.1
$region0: #{tpu_custom_call.1}
  #allocation0 [shape = 'u32[]', space=smem, size = 0x4, offset = 0x4, fixed_abs, tag = 'smem constant byte address 0x4 - core index']
  #allocation1 [shape = 'u32[144,128]{1,0:T(1,128)}', space=vmem, size = 0x12000, scoped, tag = 'internal scratch']
  #allocation2 [shape = 'f32[1,1]{1,0:T(1,128)S(6)}', space=smem, size = 0x200, scoped, tag = 'scoped memory for tpu_custom_call.1']
  %s0 = inlined_call_operand.vmem [shape: f32[32,16], index: 0, kind: input, shape index: {}]
  %s1 = inlined_call_operand.vmem [shape: f32[32,16], index: 1, kind: input, shape index: {}]
  %s2 = inlined_call_operand.vmem [shape: f32[16,48], index: 2, kind: input, shape index: {}]
  %s3 = inlined_call_operand.vmem [shape: f32[1,16], index: 3, kind: input, shape index: {}]
  %s4 = inlined_call_operand.vmem [shape: f32[16,48], index: 4, kind: input, shape index: {}]
  %s5 = inlined_call_operand.vmem [shape: f32[1,16], index: 5, kind: input, shape index: {}]
  %s6 = inlined_call_operand.vmem [shape: f32[1,16], index: 6, kind: input, shape index: {}]
  %s7 = inlined_call_operand.<no memory space> [shape: f32[1,1], index: 7, kind: input, shape index: {}]
  %s8 = inlined_call_operand.hbm [shape: f32[32,32], index: 8, kind: output, shape index: {}]
  %s9 = sld [smem:[#allocation0]]
  $region65: #{tpu_custom_call.1} parent=0
    _
  %s11 = ssub.s32 1, %s9
  %s12 = scalar_select 0, %s11, %s9
  %13 = sst [smem:[#allocation2]] %s7
  $region1: #{tpu_custom_call.1} parent=0
    #allocation3 [shape = 'u8[16384]{0}', space=vmem, size = 0x4000, scoped, tag = 'output window, operand 0']
    #allocation4 [shape = 's32[2]{0}', space=sflag, size = 0x8, scoped, tag = 'scoped memory for tpu_custom_call.1']
    %14 = vsyncpa [#allocation4], 0
    %s15 = scalar_lea.sflag [#allocation4], 1
    %16 = vsyncpa %s15, 0
    loop: start=0, step=1, limit=4
    $region2: #{tpu_custom_call.1} parent=1 // loop_pre_header
      _
    $region3: #{tpu_custom_call.1} parent=1 // loop_header
      %s18 = sphi 0, %s22
      %p19 = scmp.ge.s32.totalorder %s18, 4
      %s28 = sphi 0, %s30
      %s31 = sphi 0, %s28
      %s32 = sphi 0, %s31
      %s48 = sphi 0, %s32
      %s54 = sphi 0, %s56
      %s57 = sphi 0, %s54
      %s58 = sphi 0, %s57
      %s74 = sphi 0, %s58
      %s78 = sphi 0, %s78
      %s80 = sphi 0, %s78
      %s81 = sphi 0, %s80
      %s95 = sphi 0, %s81
      %s99 = sphi 0, %s99
      %s101 = sphi 0, %s99
      %s102 = sphi 0, %s101
      %s116 = sphi 0, %s102
      %s120 = sphi 0, %s120
      %s122 = sphi 0, %s120
      %s123 = sphi 0, %s122
      %s137 = sphi 0, %s123
      %s141 = sphi 0, %s141
      %s143 = sphi 0, %s141
      %s144 = sphi 0, %s143
      %s158 = sphi 0, %s144
      %s162 = sphi 0, %s162
      %s164 = sphi 0, %s162
      %s165 = sphi 0, %s164
      %s179 = sphi 0, %s165
      %s183 = sphi 0, %s183
      %s185 = sphi 0, %s183
      %s186 = sphi 0, %s185
      %s200 = sphi 0, %s186
      %s206 = sphi 0, %s208
      %s209 = sphi 0, %s206
      %s210 = sphi 0, %s209
      %s226 = sphi 0, %s210
    $region4: #{tpu_custom_call.1} parent=1 // loop_header_branch
      %21 = sbr.rel (%p19) target = $region8
    $region5: #{tpu_custom_call.1} parent=1 // loop_body
      %s23 = ssub.s32 %s18, 1
      %s24 = ssub.s32 %s18, 2
      %s25 = sadd.s32 %s18, 1
      %s26 = ssub.s32 %s18, %s25
      %p27 = scmp.eq.s32.totalorder %s26, 0
      %s29 = sadd.s32 %s28, 1
      %s30 = scalar_select %p27, %s28, %s29
      %p33 = pneg %p27
      %p34 = scmp.eq.s32.totalorder %s18, 1
      %p35 = por %p33, %p34
      %p36 = scmp.ne.s32.totalorder %s28, %s31
      %p37 = scmp.eq.s32.totalorder %s18, 0
      %p38 = por %p36, %p37
      %p39 = scmp.ne.s32.totalorder %s28, %s31
      %p40 = scmp.eq.s32.totalorder %s23, 1
      %p41 = por %p39, %p40
      %p42 = scmp.ne.s32.totalorder %s31, %s32
      %p43 = scmp.eq.s32.totalorder %s23, 0
      %p44 = por %p42, %p43
      %p45 = scmp.ne.s32.totalorder %s31, %s32
      %p46 = scmp.eq.s32.totalorder %s24, 1
      %p47 = por %p45, %p46
      %p49 = scmp.ne.s32.totalorder %s32, %s48
      %p50 = scmp.eq.s32.totalorder %s24, 0
      %p51 = por %p49, %p50
      %s52 = ssub.s32 %s18, %s25
      %p53 = scmp.eq.s32.totalorder %s52, 0
      %s55 = sadd.s32 %s54, 1
      %s56 = scalar_select %p53, %s54, %s55
      %p59 = pneg %p53
      %p60 = scmp.eq.s32.totalorder %s18, 1
      %p61 = por %p59, %p60
      %p62 = scmp.ne.s32.totalorder %s54, %s57
      %p63 = scmp.eq.s32.totalorder %s18, 0
      %p64 = por %p62, %p63
      %p65 = scmp.ne.s32.totalorder %s54, %s57
      %p66 = scmp.eq.s32.totalorder %s23, 1
      %p67 = por %p65, %p66
      %p68 = scmp.ne.s32.totalorder %s57, %s58
      %p69 = scmp.eq.s32.totalorder %s23, 0
      %p70 = por %p68, %p69
      %p71 = scmp.ne.s32.totalorder %s57, %s58
      %p72 = scmp.eq.s32.totalorder %s24, 1
      %p73 = por %p71, %p72
      %p75 = scmp.ne.s32.totalorder %s58, %s74
      %p76 = scmp.eq.s32.totalorder %s24, 0
      %p77 = por %p75, %p76
      %s79 = sadd.s32 %s78, 1
      %p82 = scmp.eq.s32.totalorder %s18, 1
      %p83 = scmp.ne.s32.totalorder %s78, %s80
      %p84 = scmp.eq.s32.totalorder %s18, 0
      %p85 = por %p83, %p84
      %p86 = scmp.ne.s32.totalorder %s78, %s80
      %p87 = scmp.eq.s32.totalorder %s23, 1
      %p88 = por %p86, %p87
      %p89 = scmp.ne.s32.totalorder %s80, %s81
      %p90 = scmp.eq.s32.totalorder %s23, 0
      %p91 = por %p89, %p90
      %p92 = scmp.ne.s32.totalorder %s80, %s81
      %p93 = scmp.eq.s32.totalorder %s24, 1
      %p94 = por %p92, %p93
      %p96 = scmp.ne.s32.totalorder %s81, %s95
      %p97 = scmp.eq.s32.totalorder %s24, 0
      %p98 = por %p96, %p97
      %s100 = sadd.s32 %s99, 1
      %p103 = scmp.eq.s32.totalorder %s18, 1
      %p104 = scmp.ne.s32.totalorder %s99, %s101
      %p105 = scmp.eq.s32.totalorder %s18, 0
      %p106 = por %p104, %p105
      %p107 = scmp.ne.s32.totalorder %s99, %s101
      %p108 = scmp.eq.s32.totalorder %s23, 1
      %p109 = por %p107, %p108
      %p110 = scmp.ne.s32.totalorder %s101, %s102
      %p111 = scmp.eq.s32.totalorder %s23, 0
      %p112 = por %p110, %p111
      %p113 = scmp.ne.s32.totalorder %s101, %s102
      %p114 = scmp.eq.s32.totalorder %s24, 1
      %p115 = por %p113, %p114
      %p117 = scmp.ne.s32.totalorder %s102, %s116
      %p118 = scmp.eq.s32.totalorder %s24, 0
      %p119 = por %p117, %p118
      %s121 = sadd.s32 %s120, 1
      %p124 = scmp.eq.s32.totalorder %s18, 1
      %p125 = scmp.ne.s32.totalorder %s120, %s122
      %p126 = scmp.eq.s32.totalorder %s18, 0
      %p127 = por %p125, %p126
      %p128 = scmp.ne.s32.totalorder %s120, %s122
      %p129 = scmp.eq.s32.totalorder %s23, 1
      %p130 = por %p128, %p129
      %p131 = scmp.ne.s32.totalorder %s122, %s123
      %p132 = scmp.eq.s32.totalorder %s23, 0
      %p133 = por %p131, %p132
      %p134 = scmp.ne.s32.totalorder %s122, %s123
      %p135 = scmp.eq.s32.totalorder %s24, 1
      %p136 = por %p134, %p135
      %p138 = scmp.ne.s32.totalorder %s123, %s137
      %p139 = scmp.eq.s32.totalorder %s24, 0
      %p140 = por %p138, %p139
      %s142 = sadd.s32 %s141, 1
      %p145 = scmp.eq.s32.totalorder %s18, 1
      %p146 = scmp.ne.s32.totalorder %s141, %s143
      %p147 = scmp.eq.s32.totalorder %s18, 0
      %p148 = por %p146, %p147
      %p149 = scmp.ne.s32.totalorder %s141, %s143
      %p150 = scmp.eq.s32.totalorder %s23, 1
      %p151 = por %p149, %p150
      %p152 = scmp.ne.s32.totalorder %s143, %s144
      %p153 = scmp.eq.s32.totalorder %s23, 0
      %p154 = por %p152, %p153
      %p155 = scmp.ne.s32.totalorder %s143, %s144
      %p156 = scmp.eq.s32.totalorder %s24, 1
      %p157 = por %p155, %p156
      %p159 = scmp.ne.s32.totalorder %s144, %s158
      %p160 = scmp.eq.s32.totalorder %s24, 0
      %p161 = por %p159, %p160
      %s163 = sadd.s32 %s162, 1
      %p166 = scmp.eq.s32.totalorder %s18, 1
      %p167 = scmp.ne.s32.totalorder %s162, %s164
      %p168 = scmp.eq.s32.totalorder %s18, 0
      %p169 = por %p167, %p168
      %p170 = scmp.ne.s32.totalorder %s162, %s164
      %p171 = scmp.eq.s32.totalorder %s23, 1
      %p172 = por %p170, %p171
      %p173 = scmp.ne.s32.totalorder %s164, %s165
      %p174 = scmp.eq.s32.totalorder %s23, 0
      %p175 = por %p173, %p174
      %p176 = scmp.ne.s32.totalorder %s164, %s165
      %p177 = scmp.eq.s32.totalorder %s24, 1
      %p178 = por %p176, %p177
      %p180 = scmp.ne.s32.totalorder %s165, %s179
      %p181 = scmp.eq.s32.totalorder %s24, 0
      %p182 = por %p180, %p181
      %s184 = sadd.s32 %s183, 1
      %p187 = scmp.eq.s32.totalorder %s18, 1
      %p188 = scmp.ne.s32.totalorder %s183, %s185
      %p189 = scmp.eq.s32.totalorder %s18, 0
      %p190 = por %p188, %p189
      %p191 = scmp.ne.s32.totalorder %s183, %s185
      %p192 = scmp.eq.s32.totalorder %s23, 1
      %p193 = por %p191, %p192
      %p194 = scmp.ne.s32.totalorder %s185, %s186
      %p195 = scmp.eq.s32.totalorder %s23, 0
      %p196 = por %p194, %p195
      %p197 = scmp.ne.s32.totalorder %s185, %s186
      %p198 = scmp.eq.s32.totalorder %s24, 1
      %p199 = por %p197, %p198
      %p201 = scmp.ne.s32.totalorder %s186, %s200
      %p202 = scmp.eq.s32.totalorder %s24, 0
      %p203 = por %p201, %p202
      %s204 = ssub.s32 %s18, %s25
      %p205 = scmp.eq.s32.totalorder %s204, 0
      %s207 = sadd.s32 %s206, 1
      %s208 = scalar_select %p205, %s206, %s207
      %p211 = pneg %p205
      %p212 = scmp.eq.s32.totalorder %s18, 1
      %p213 = por %p211, %p212
      %p214 = scmp.ne.s32.totalorder %s206, %s209
      %p215 = scmp.eq.s32.totalorder %s18, 0
      %p216 = por %p214, %p215
      %p217 = scmp.ne.s32.totalorder %s206, %s209
      %p218 = scmp.eq.s32.totalorder %s23, 1
      %p219 = por %p217, %p218
      %p220 = scmp.ne.s32.totalorder %s209, %s210
      %p221 = scmp.eq.s32.totalorder %s23, 0
      %p222 = por %p220, %p221
      %p223 = scmp.ne.s32.totalorder %s209, %s210
      %p224 = scmp.eq.s32.totalorder %s24, 1
      %p225 = por %p223, %p224
      %p227 = scmp.ne.s32.totalorder %s210, %s226
      %p228 = scmp.eq.s32.totalorder %s24, 0
      %p229 = por %p227, %p228
      %p230 = scmp.le.s32.totalorder 1, %s18
      %p231 = scmp.lt.s32.totalorder %s18, 3
      %p232 = pnand %p230, %p231
      %p233 = pneg %p232
      // Predicated region
      $region9: #{tpu_custom_call.1} parent=5 // pred_check
        _
      $region10: #{tpu_custom_call.1} parent=5 // pred_check_branch
        %235 = sbr.rel (%p232) target = $region12
      $region11: #{tpu_custom_call.1} parent=5 // pred_region
        %s236 = ssub.s32 %s18, 1
        // Predicated region
        $region13: #{tpu_custom_call.1} parent=11 // pred_check
          %p237 = pneg %p91
        $region14: #{tpu_custom_call.1} parent=11 // pred_check_branch
          %239 = sbr.rel (%p237) target = $region16
        $region15: #{tpu_custom_call.1} parent=11 // pred_region
          _
        $region16: #{tpu_custom_call.1} parent=11 // pred_fallthru
          _
        // Predicated region
        $region17: #{tpu_custom_call.1} parent=11 // pred_check
          %p240 = pneg %p112
        $region18: #{tpu_custom_call.1} parent=11 // pred_check_branch
          %242 = sbr.rel (%p240) target = $region20
        $region19: #{tpu_custom_call.1} parent=11 // pred_region
          _
        $region20: #{tpu_custom_call.1} parent=11 // pred_fallthru
          _
        // Predicated region
        $region21: #{tpu_custom_call.1} parent=11 // pred_check
          %p243 = pneg %p133
        $region22: #{tpu_custom_call.1} parent=11 // pred_check_branch
          %245 = sbr.rel (%p243) target = $region24
        $region23: #{tpu_custom_call.1} parent=11 // pred_region
          _
        $region24: #{tpu_custom_call.1} parent=11 // pred_fallthru
          _
        // Predicated region
        $region25: #{tpu_custom_call.1} parent=11 // pred_check
          %p246 = pneg %p154
        $region26: #{tpu_custom_call.1} parent=11 // pred_check_branch
          %248 = sbr.rel (%p246) target = $region28
        $region27: #{tpu_custom_call.1} parent=11 // pred_region
          _
        $region28: #{tpu_custom_call.1} parent=11 // pred_fallthru
          _
        // Predicated region
        $region29: #{tpu_custom_call.1} parent=11 // pred_check
          %p249 = pneg %p175
        $region30: #{tpu_custom_call.1} parent=11 // pred_check_branch
          %251 = sbr.rel (%p249) target = $region32
        $region31: #{tpu_custom_call.1} parent=11 // pred_region
          _
        $region32: #{tpu_custom_call.1} parent=11 // pred_fallthru
          _
        // Predicated region
        $region33: #{tpu_custom_call.1} parent=11 // pred_check
          %p252 = pneg %p196
        $region34: #{tpu_custom_call.1} parent=11 // pred_check_branch
          %254 = sbr.rel (%p252) target = $region36
        $region35: #{tpu_custom_call.1} parent=11 // pred_region
          _
        $region36: #{tpu_custom_call.1} parent=11 // pred_fallthru
          _
      $region12: #{tpu_custom_call.1} parent=5 // pred_fallthru
        _
      %p255 = scmp.lt.s32.totalorder %s18, 2
      // Predicated region
      $region37: #{tpu_custom_call.1} parent=5 // pred_check
        %p256 = pneg %p255
      $region38: #{tpu_custom_call.1} parent=5 // pred_check_branch
        %258 = sbr.rel (%p256) target = $region40
      $region39: #{tpu_custom_call.1} parent=5 // pred_region
        // Predicated region
        $region41: #{tpu_custom_call.1} parent=39 // pred_check
          %p259 = pneg %p38
        $region42: #{tpu_custom_call.1} parent=39 // pred_check_branch
          %261 = sbr.rel (%p259) target = $region44
        $region43: #{tpu_custom_call.1} parent=39 // pred_region
          %s262 = smul.u32 2, %s18
          %p263 = scmp.lt.s32.totalorder %s262, 3
          %s264 = scalar_select %p263, %s262, 3
          %s265 = smul.addr %s264, 8
          %s266 = scalar_lea.vmem %s0, %s265
          %s267 = smul.u32 2, %s18
        $region44: #{tpu_custom_call.1} parent=39 // pred_fallthru
          _
        // Predicated region
        $region45: #{tpu_custom_call.1} parent=39 // pred_check
          %p268 = pneg %p64
        $region46: #{tpu_custom_call.1} parent=39 // pred_check_branch
          %270 = sbr.rel (%p268) target = $region48
        $region47: #{tpu_custom_call.1} parent=39 // pred_region
          %s271 = smul.u32 2, %s18
          %p272 = scmp.lt.s32.totalorder %s271, 3
          %s273 = scalar_select %p272, %s271, 3
          %s274 = smul.addr %s273, 8
          %s275 = scalar_lea.vmem %s1, %s274
          %s276 = smul.u32 2, %s18
        $region48: #{tpu_custom_call.1} parent=39 // pred_fallthru
          _
      $region40: #{tpu_custom_call.1} parent=5 // pred_fallthru
        _
      %p277 = scmp.le.s32.totalorder 1, %s18
      %p278 = scmp.lt.s32.totalorder %s18, 3
      %p279 = pnand %p277, %p278
      %p280 = pneg %p279
      // Predicated region
      $region49: #{tpu_custom_call.1} parent=5 // pred_check
        _
      $region50: #{tpu_custom_call.1} parent=5 // pred_check_branch
        %282 = sbr.rel (%p279) target = $region52
      $region51: #{tpu_custom_call.1} parent=5 // pred_region
        %s283 = ssub.s32 %s18, 1
        %s284 = smul.u32 2, %s23
        %p285 = scmp.lt.s32.totalorder %s284, 3
        %s286 = scalar_select %p285, %s284, 3
        %s287 = smul.addr %s286, 8
        %s288 = scalar_lea.vmem %s0, %s287
        %p289 = pneg %p44
        %p290 = pneg %p41
        %s291 = smul.u32 2, %s23
        %p292 = scmp.lt.s32.totalorder %s291, 3
        %s293 = scalar_select %p292, %s291, 3
        %s294 = smul.addr %s293, 8
        %s295 = scalar_lea.vmem %s1, %s294
        %p296 = pneg %p70
        %p297 = pneg %p67
        %p298 = pneg %p91
        %p299 = pneg %p88
        %p300 = pneg %p112
        %p301 = pneg %p109
        %p302 = pneg %p133
        %p303 = pneg %p130
        %p304 = pneg %p154
        %p305 = pneg %p151
        %p306 = pneg %p175
        %p307 = pneg %p172
        %p308 = pneg %p196
        %p309 = pneg %p193
        %p310 = pneg %p222
        %p311 = pneg %p219
        %s312 = sand.u32 %s209, 1
        %s313 = scalar_lea.sflag [#allocation4], %s312
        %s314 = sand.u32 %s209, 1
        %s315 = smul.addr %s314, 16
        %s316 = scalar_lea.vmem [#allocation3], %s315
        %s317 = smul.u32 2, %s23
        %p318 = scmp.lt.s32.totalorder %s317, 3
        %s319 = scalar_select %p318, %s317, 3
        %s320 = smul.addr %s319, 8
        %s321 = scalar_lea.vmem %s0, %s320
        %s322 = smul.u32 2, %s23
        %s323 = smul.u32 2, %s23
        %p324 = scmp.lt.s32.totalorder %s323, 3
        %s325 = scalar_select %p324, %s323, 3
        %s326 = smul.addr %s325, 8
        %s327 = scalar_lea.vmem %s1, %s326
        %s328 = smul.u32 2, %s23
        %s329 = smul.u32 2, %s23
        %v330 = vld [vmem:[%s321] sm:$0xff]
        %v331 = vld [vmem:[%s321 + $0x8] sm:$0xff]
        %v332 = vld [vmem:[%s327] sm:$0xff]
        %v333 = vld [vmem:[%s327 + $0x8] sm:$0xff]
        %v334 = vlaneseq
        %v335 = vshrl.u32 %v334, 7
        %v336 = vadd.s32 %v335, 8
        %vm337 = vcmp.lt.s32.totalorder %v335, 0
        %v338 = vsub.s32 0, %v335
        %v339 = vsel %vm337, %v338, %v335
        %v340 = vshrl.u32 %v339, 4
        %v341 = vand.u32 %v339, 15
        %v342 = vsub.s32 0, %v341
        %v343 = vsel %vm337, %v342, %v341
        %vm344 = vcmp.lt.s32.totalorder %v336, 0
        %v345 = vsub.s32 0, %v336
        %v346 = vsel %vm344, %v345, %v336
        %v347 = vshrl.u32 %v346, 4
        %v348 = vand.u32 %v346, 15
        %v349 = vsub.s32 0, %v348
        %v350 = vsel %vm344, %v349, %v348
        %vm351 = vcmp.ne.s32.totalorder %v343, 0
        %vm352 = vcmp.ne.s32.totalorder %v350, 0
        %vm353 = vcmp.lt.s32.totalorder %v343, 0
        %vm354 = vcmp.lt.s32.totalorder %v350, 0
        %vm355 = vmand %vm353, %vm351
        %vm356 = vmand %vm354, %vm352
        %v357 = vadd.s32 %v343, 16
        %v358 = vadd.s32 %v350, 16
        %v359 = vsel %vm355, %v357, %v343
        %v360 = vsel %vm356, %v358, %v350
        %vm361 = vcmp.ne.s32.totalorder %v359, 0
        %vm362 = vcmp.ne.s32.totalorder %v360, 0
        %v363 = vsel %vm361, 1, 0
        %v364 = vsel %vm362, 1, 0
        %v365 = vcvt.s32.f32 %v363
        %v366 = vcvt.s32.f32 %v364
        %vm367 = vcmp.ne.s32.totalorder %v359, 15
        %vm368 = vcmp.ne.s32.totalorder %v360, 15
        %v369 = vsel %vm367, 1, 0
        %v370 = vsel %vm368, 1, 0
        %v371 = vcvt.s32.f32 %v369
        %v372 = vcvt.s32.f32 %v370
        %v373 = vld [vmem:[%s2] sm:$0xff]
        %v374 = vld [vmem:[%s2 + $0x8] sm:$0xff]
        %v375 = vld [vmem:[%s3] sm:$0x1]
        %vm376 = vcmask 130048
        %v378 = vsel %vm376, %v330, 0
        %v381 = vsel %vm376, %v331, 0
        %383 = vmatprep.subr.mxu0 0.0
        %384 = vmatpush1.msra.mxu0 %v373
        %385 = vmatprep.subr.mxu0 0.0
        %386 = vmatpush1.msra.mxu0 %v374
        %387 = vmatprep.subr.mxu0 0.0
        %388 = vmatpush1.msra.mxu0 0.0
        %389 = vmatprep.subr.mxu0 0.0
        %390 = vmatpush1.msra.mxu0 0.0
        %391 = vmatprep.subr.mxu0 0.0
        %392 = vmatpush1.msra.mxu0 0.0
        %393 = vmatprep.subr.mxu0 0.0
        %394 = vmatpush1.msra.mxu0 0.0
        %395 = vmatprep.subr.mxu0 0.0
        %396 = vmatpush1.msra.mxu0 0.0
        %397 = vmatprep.subr.mxu0 0.0
        %398 = vmatpush1.msra.mxu0 0.0
        %399 = vmatprep.subr.mxu0 0.0
        %400 = vmatpush1.msra.mxu0 0.0
        %401 = vmatprep.subr.mxu0 0.0
        %402 = vmatpush1.msra.mxu0 0.0
        %403 = vmatprep.subr.mxu0 0.0
        %404 = vmatpush1.msra.mxu0 0.0
        %405 = vmatprep.subr.mxu0 0.0
        %406 = vmatpush1.msra.mxu0 0.0
        %407 = vmatprep.subr.mxu0 0.0
        %408 = vmatpush1.msra.mxu0 0.0
        %409 = vmatprep.subr.mxu0 0.0
        %410 = vmatpush1.msra.mxu0 0.0
        %411 = vmatprep.subr.mxu0 0.0
        %412 = vmatpush1.msra.mxu0 0.0
        %413 = vmatprep.subr.mxu0 0.0
        %414 = vmatpush1.msra.mxu0 0.0
        %415 = vmatprep.subr.mxu0 0.0
        %416 = vmatpush1.msra.mxu0 0.0
        %417 = vmatprep.subr.mxu0 0.0
        %418 = vmatpush1.msra.mxu0 0.0
        %419 = vmatprep.subr.mxu0 0.0
        %420 = vmatpush1.msra.mxu0 0.0
        %421 = vmatprep.subr.mxu0 0.0
        %422 = vmatpush1.msra.mxu0 0.0
        %423 = vmatprep.subr.mxu0 0.0
        %424 = vmatpush1.msra.mxu0 0.0
        %425 = vmatprep.subr.mxu0 0.0
        %426 = vmatpush1.msra.mxu0 0.0
        %427 = vmatprep.subr.mxu0 0.0
        %428 = vmatpush1.msra.mxu0 0.0
        %429 = vmatprep.subr.mxu0 0.0
        %430 = vmatpush1.msra.mxu0 0.0
        %431 = vmatprep.subr.mxu0 0.0
        %432 = vmatpush1.msra.mxu0 0.0
        %433 = vmatprep.subr.mxu0 0.0
        %434 = vmatpush1.msra.mxu0 0.0
        %435 = vmatprep.subr.mxu0 0.0
        %436 = vmatpush1.msra.mxu0 0.0
        %437 = vmatprep.subr.mxu0 0.0
        %438 = vmatpush1.msra.mxu0 0.0
        %439 = vmatprep.subr.mxu0 0.0
        %440 = vmatpush1.msra.mxu0 0.0
        %441 = vmatprep.subr.mxu0 0.0
        %442 = vmatpush1.msra.mxu0 0.0
        %443 = vmatprep.subr.mxu0 0.0
        %444 = vmatpush1.msra.mxu0 0.0
        %445 = vmatprep.subr.mxu0 0.0
        %446 = vmatpush1.msra.mxu0 0.0
        %447 = vmatprep.mubr.f32.mxu0 0.0
        %448 = vmatmul.mubr.f32.gmra.mrb[0].mxu0 %v378
        %v449 = vpop.f32.mrb[0].mxu0
        %v450 = vadd.f32 0.0, %v449
        %v451 = vpop.f32.mrb[0].mxu0
        %452 = vmatprep.mubr.f32.mxu0 0.0
        %453 = vmatmul.mubr.f32.gmra.mrb[0].mxu0 %v381
        %v454 = vpop.f32.mrb[0].mxu0
        %v455 = vadd.f32 0.0, %v454
        %v456 = vpop.f32.mrb[0].mxu0
        %457 = vdwg.mxu0
        %v458 = vrot.slane %v450, 7
        %v459 = vrot.slane %v455, 7
        %vm460 = vcmp.lt.s32.totalorder %v335, 1
        %v461 = vsel %vm460, %v458, %v459
        %v462 = vsel %vm460, %v459, %v458
        %v463 = vmul.f32 %v462, %v365
        %v464 = vmul.f32 %v461, %v366
        %467 = vrot.lane.b32.xlu0 %v450, 96
        %v468 = vpop.permute.xlu0 %467
        %469 = vrot.lane.b32.xlu0 %v455, 96
        %v470 = vpop.permute.xlu0 %469
        %v473 = vrot.slane %v468, 1
        %v474 = vrot.slane %v470, 1
        %vm475 = vcmp.lt.s32.totalorder %v335, 7
        %v476 = vsel %vm475, %v473, %v474
        %v477 = vsel %vm475, %v474, %v473
        %v478 = vmul.f32 %v476, %v371
        %v479 = vmul.f32 %v477, %v372
        %480 = vrot.lane.b32.xlu0 %v450, 112
        %v481 = vpop.permute.xlu0 %480
        %482 = vrot.lane.b32.xlu0 %v455, 112
        %v483 = vpop.permute.xlu0 %482
        %v486 = vadd.f32 %v463, %v481
        %v487 = vadd.f32 %v464, %v483
        %v488 = vadd.f32 %v486, %v478
        %v489 = vadd.f32 %v487, %v479
        %v491 = vlaneseq
        %v492 = vshrl.u32 %v491, 7
        %v493 = vsub.s32 0, %v492
        %v494 = vrot.slane %v375, %v493
        %v496 = vadd.f32 %v488, %v494
        %v497 = vadd.f32 %v489, %v494
        %v498 = vtanh.pop %v496
        %v499 = vtanh.pop %v497
        %v500 = vld [vmem:[%s4] sm:$0xff]
        %v501 = vld [vmem:[%s4 + $0x8] sm:$0xff]
        %v502 = vld [vmem:[%s5] sm:$0x1]
        %v504 = vsel %vm376, %v332, 0
        %v507 = vsel %vm376, %v333, 0
        %509 = vmatprep.subr.mxu0 0.0
        %510 = vmatpush1.msra.mxu0 %v500
        %511 = vmatprep.subr.mxu0 0.0
        %512 = vmatpush1.msra.mxu0 %v501
        %513 = vmatprep.subr.mxu0 0.0
        %514 = vmatpush1.msra.mxu0 0.0
        %515 = vmatprep.subr.mxu0 0.0
        %516 = vmatpush1.msra.mxu0 0.0
        %517 = vmatprep.subr.mxu0 0.0
        %518 = vmatpush1.msra.mxu0 0.0
        %519 = vmatprep.subr.mxu0 0.0
        %520 = vmatpush1.msra.mxu0 0.0
        %521 = vmatprep.subr.mxu0 0.0
        %522 = vmatpush1.msra.mxu0 0.0
        %523 = vmatprep.subr.mxu0 0.0
        %524 = vmatpush1.msra.mxu0 0.0
        %525 = vmatprep.subr.mxu0 0.0
        %526 = vmatpush1.msra.mxu0 0.0
        %527 = vmatprep.subr.mxu0 0.0
        %528 = vmatpush1.msra.mxu0 0.0
        %529 = vmatprep.subr.mxu0 0.0
        %530 = vmatpush1.msra.mxu0 0.0
        %531 = vmatprep.subr.mxu0 0.0
        %532 = vmatpush1.msra.mxu0 0.0
        %533 = vmatprep.subr.mxu0 0.0
        %534 = vmatpush1.msra.mxu0 0.0
        %535 = vmatprep.subr.mxu0 0.0
        %536 = vmatpush1.msra.mxu0 0.0
        %537 = vmatprep.subr.mxu0 0.0
        %538 = vmatpush1.msra.mxu0 0.0
        %539 = vmatprep.subr.mxu0 0.0
        %540 = vmatpush1.msra.mxu0 0.0
        %541 = vmatprep.subr.mxu0 0.0
        %542 = vmatpush1.msra.mxu0 0.0
        %543 = vmatprep.subr.mxu0 0.0
        %544 = vmatpush1.msra.mxu0 0.0
        %545 = vmatprep.subr.mxu0 0.0
        %546 = vmatpush1.msra.mxu0 0.0
        %547 = vmatprep.subr.mxu0 0.0
        %548 = vmatpush1.msra.mxu0 0.0
        %549 = vmatprep.subr.mxu0 0.0
        %550 = vmatpush1.msra.mxu0 0.0
        %551 = vmatprep.subr.mxu0 0.0
        %552 = vmatpush1.msra.mxu0 0.0
        %553 = vmatprep.subr.mxu0 0.0
        %554 = vmatpush1.msra.mxu0 0.0
        %555 = vmatprep.subr.mxu0 0.0
        %556 = vmatpush1.msra.mxu0 0.0
        %557 = vmatprep.subr.mxu0 0.0
        %558 = vmatpush1.msra.mxu0 0.0
        %559 = vmatprep.subr.mxu0 0.0
        %560 = vmatpush1.msra.mxu0 0.0
        %561 = vmatprep.subr.mxu0 0.0
        %562 = vmatpush1.msra.mxu0 0.0
        %563 = vmatprep.subr.mxu0 0.0
        %564 = vmatpush1.msra.mxu0 0.0
        %565 = vmatprep.subr.mxu0 0.0
        %566 = vmatpush1.msra.mxu0 0.0
        %567 = vmatprep.subr.mxu0 0.0
        %568 = vmatpush1.msra.mxu0 0.0
        %569 = vmatprep.subr.mxu0 0.0
        %570 = vmatpush1.msra.mxu0 0.0
        %571 = vmatprep.subr.mxu0 0.0
        %572 = vmatpush1.msra.mxu0 0.0
        %573 = vmatprep.mubr.f32.mxu0 0.0
        %574 = vmatmul.mubr.f32.gmra.mrb[0].mxu0 %v504
        %v575 = vpop.f32.mrb[0].mxu0
        %v576 = vadd.f32 0.0, %v575
        %v577 = vpop.f32.mrb[0].mxu0
        %578 = vmatprep.mubr.f32.mxu0 0.0
        %579 = vmatmul.mubr.f32.gmra.mrb[0].mxu0 %v507
        %v580 = vpop.f32.mrb[0].mxu0
        %v581 = vadd.f32 0.0, %v580
        %v582 = vpop.f32.mrb[0].mxu0
        %583 = vdwg.mxu0
        %v584 = vrot.slane %v576, 7
        %v585 = vrot.slane %v581, 7
        %v586 = vsel %vm460, %v584, %v585
        %v587 = vsel %vm460, %v585, %v584
        %v588 = vmul.f32 %v587, %v365
        %v589 = vmul.f32 %v586, %v366
        %592 = vrot.lane.b32.xlu0 %v576, 96
        %v593 = vpop.permute.xlu0 %592
        %594 = vrot.lane.b32.xlu0 %v581, 96
        %v595 = vpop.permute.xlu0 %594
        %v598 = vrot.slane %v593, 1
        %v599 = vrot.slane %v595, 1
        %v600 = vsel %vm475, %v598, %v599
        %v601 = vsel %vm475, %v599, %v598
        %v602 = vmul.f32 %v600, %v371
        %v603 = vmul.f32 %v601, %v372
        %604 = vrot.lane.b32.xlu0 %v576, 112
        %v605 = vpop.permute.xlu0 %604
        %606 = vrot.lane.b32.xlu0 %v581, 112
        %v607 = vpop.permute.xlu0 %606
        %v610 = vadd.f32 %v588, %v605
        %v611 = vadd.f32 %v589, %v607
        %v612 = vadd.f32 %v610, %v602
        %v613 = vadd.f32 %v611, %v603
        %v615 = vlaneseq
        %v616 = vshrl.u32 %v615, 7
        %v617 = vsub.s32 0, %v616
        %v618 = vrot.slane %v502, %v617
        %v620 = vadd.f32 %v612, %v618
        %v621 = vadd.f32 %v613, %v618
        %v622 = vtanh.pop %v620
        %v623 = vtanh.pop %v621
        %v624 = vadd.f32 %v498, %v622
        %v625 = vadd.f32 %v499, %v623
        %v626 = vld [vmem:[%s6] sm:$0x1]
        %s627 = sld [smem:[#allocation2]]
        %v628 = vstv %s627
        %v630 = vsel %vm376, %v626, 0
        %632 = vmatprep.subr.mxu0 0.0
        %633 = vmatpush1.msra.mxu0 %v624
        %634 = vmatprep.subr.mxu0 0.0
        %635 = vmatpush1.msra.mxu0 %v625
        %636 = vmatprep.subr.mxu0 0.0
        %637 = vmatpush1.msra.mxu0 0.0
        %638 = vmatprep.subr.mxu0 0.0
        %639 = vmatpush1.msra.mxu0 0.0
        %640 = vmatprep.subr.mxu0 0.0
        %641 = vmatpush1.msra.mxu0 0.0
        %642 = vmatprep.subr.mxu0 0.0
        %643 = vmatpush1.msra.mxu0 0.0
        %644 = vmatprep.subr.mxu0 0.0
        %645 = vmatpush1.msra.mxu0 0.0
        %646 = vmatprep.subr.mxu0 0.0
        %647 = vmatpush1.msra.mxu0 0.0
        %648 = vmatprep.subr.mxu0 0.0
        %649 = vmatpush1.msra.mxu0 0.0
        %650 = vmatprep.subr.mxu0 0.0
        %651 = vmatpush1.msra.mxu0 0.0
        %652 = vmatprep.subr.mxu0 0.0
        %653 = vmatpush1.msra.mxu0 0.0
        %654 = vmatprep.subr.mxu0 0.0
        %655 = vmatpush1.msra.mxu0 0.0
        %656 = vmatprep.subr.mxu0 0.0
        %657 = vmatpush1.msra.mxu0 0.0
        %658 = vmatprep.subr.mxu0 0.0
        %659 = vmatpush1.msra.mxu0 0.0
        %660 = vmatprep.subr.mxu0 0.0
        %661 = vmatpush1.msra.mxu0 0.0
        %662 = vmatprep.subr.mxu0 0.0
        %663 = vmatpush1.msra.mxu0 0.0
        %664 = vmatprep.subr.mxu0 0.0
        %665 = vmatpush1.msra.mxu0 0.0
        %666 = vmatprep.subr.mxu0 0.0
        %667 = vmatpush1.msra.mxu0 0.0
        %668 = vmatprep.subr.mxu0 0.0
        %669 = vmatpush1.msra.mxu0 0.0
        %670 = vmatprep.subr.mxu0 0.0
        %671 = vmatpush1.msra.mxu0 0.0
        %672 = vmatprep.subr.mxu0 0.0
        %673 = vmatpush1.msra.mxu0 0.0
        %674 = vmatprep.subr.mxu0 0.0
        %675 = vmatpush1.msra.mxu0 0.0
        %676 = vmatprep.subr.mxu0 0.0
        %677 = vmatpush1.msra.mxu0 0.0
        %678 = vmatprep.subr.mxu0 0.0
        %679 = vmatpush1.msra.mxu0 0.0
        %680 = vmatprep.subr.mxu0 0.0
        %681 = vmatpush1.msra.mxu0 0.0
        %682 = vmatprep.subr.mxu0 0.0
        %683 = vmatpush1.msra.mxu0 0.0
        %684 = vmatprep.subr.mxu0 0.0
        %685 = vmatpush1.msra.mxu0 0.0
        %686 = vmatprep.subr.mxu0 0.0
        %687 = vmatpush1.msra.mxu0 0.0
        %688 = vmatprep.subr.mxu0 0.0
        %689 = vmatpush1.msra.mxu0 0.0
        %690 = vmatprep.subr.mxu0 0.0
        %691 = vmatpush1.msra.mxu0 0.0
        %692 = vmatprep.subr.mxu0 0.0
        %693 = vmatpush1.msra.mxu0 0.0
        %694 = vmatprep.subr.mxu0 0.0
        %695 = vmatpush1.msra.mxu0 0.0
        %696 = vmatprep.mubr.f32.mxu0 0.0
        %697 = vmatmul.mubr.f32.gmra.mrb[0].mxu0 %v630
        %v698 = vpop.f32.mrb[0].mxu0
        %v699 = vadd.f32 %v628, %v698
        %v700 = vpop.f32.mrb[0].mxu0
        %701 = vdwg.mxu0
        %v702 = vxor.u32 %v699, 2147483648
        %v703 = vmul.f32 %v702, 1.442695
        %v704 = vpow.pop %v703
        %v705 = vadd.f32 %v704, 1.0
        %v706 = vrcp.pop %v705
        %v707 = vmul.f32 1.0, %v706
        %v708 = vlaneseq
        %v709 = vand.u32 %v708, 127
        %v710 = vmul.u32 %v709, 16
        %vm711 = vcmp.ge.s32.totalorder %v335, %v710
        %vm712 = vcmp.ge.s32.totalorder %v336, %v710
        %v713 = vadd.s32 %v710, 16
        %vm714 = vcmp.lt.s32.totalorder %v335, %v713
        %vm715 = vcmp.lt.s32.totalorder %v336, %v713
        %vm716 = vmand %vm711, %vm714
        %vm717 = vmand %vm712, %vm715
        %v718 = vsel %vm716, 1, 0
        %v719 = vsel %vm717, 1, 0
        %v720 = vcvt.s32.f32 %v718
        %v721 = vcvt.s32.f32 %v719
        %vm722 = vcmask 7168
        %v724 = vsel %vm722, %v720, 0
        %v727 = vsel %vm722, %v721, 0
        %vm729 = vcmask 1040384
        %v731 = vsel %vm729, %v707, 0
        %733 = vmatprep.subr.mxu0 0.0
        %734 = vmatpush1.msra.mxu0 %v731
        %735 = vmatprep.subr.mxu0 0.0
        %736 = vmatpush1.msra.mxu0 0.0
        %737 = vmatprep.subr.mxu0 0.0
        %738 = vmatpush1.msra.mxu0 0.0
        %739 = vmatprep.subr.mxu0 0.0
        %740 = vmatpush1.msra.mxu0 0.0
        %741 = vmatprep.subr.mxu0 0.0
        %742 = vmatpush1.msra.mxu0 0.0
        %743 = vmatprep.subr.mxu0 0.0
        %744 = vmatpush1.msra.mxu0 0.0
        %745 = vmatprep.subr.mxu0 0.0
        %746 = vmatpush1.msra.mxu0 0.0
        %747 = vmatprep.subr.mxu0 0.0
        %748 = vmatpush1.msra.mxu0 0.0
        %749 = vmatprep.subr.mxu0 0.0
        %750 = vmatpush1.msra.mxu0 0.0
        %751 = vmatprep.subr.mxu0 0.0
        %752 = vmatpush1.msra.mxu0 0.0
        %753 = vmatprep.subr.mxu0 0.0
        %754 = vmatpush1.msra.mxu0 0.0
        %755 = vmatprep.subr.mxu0 0.0
        %756 = vmatpush1.msra.mxu0 0.0
        %757 = vmatprep.subr.mxu0 0.0
        %758 = vmatpush1.msra.mxu0 0.0
        %759 = vmatprep.subr.mxu0 0.0
        %760 = vmatpush1.msra.mxu0 0.0
        %761 = vmatprep.subr.mxu0 0.0
        %762 = vmatpush1.msra.mxu0 0.0
        %763 = vmatprep.subr.mxu0 0.0
        %764 = vmatpush1.msra.mxu0 0.0
        %765 = vmatprep.subr.mxu0 0.0
        %766 = vmatpush1.msra.mxu0 0.0
        %767 = vmatprep.subr.mxu0 0.0
        %768 = vmatpush1.msra.mxu0 0.0
        %769 = vmatprep.subr.mxu0 0.0
        %770 = vmatpush1.msra.mxu0 0.0
        %771 = vmatprep.subr.mxu0 0.0
        %772 = vmatpush1.msra.mxu0 0.0
        %773 = vmatprep.subr.mxu0 0.0
        %774 = vmatpush1.msra.mxu0 0.0
        %775 = vmatprep.subr.mxu0 0.0
        %776 = vmatpush1.msra.mxu0 0.0
        %777 = vmatprep.subr.mxu0 0.0
        %778 = vmatpush1.msra.mxu0 0.0
        %779 = vmatprep.subr.mxu0 0.0
        %780 = vmatpush1.msra.mxu0 0.0
        %781 = vmatprep.subr.mxu0 0.0
        %782 = vmatpush1.msra.mxu0 0.0
        %783 = vmatprep.subr.mxu0 0.0
        %784 = vmatpush1.msra.mxu0 0.0
        %785 = vmatprep.subr.mxu0 0.0
        %786 = vmatpush1.msra.mxu0 0.0
        %787 = vmatprep.subr.mxu0 0.0
        %788 = vmatpush1.msra.mxu0 0.0
        %789 = vmatprep.subr.mxu0 0.0
        %790 = vmatpush1.msra.mxu0 0.0
        %791 = vmatprep.subr.mxu0 0.0
        %792 = vmatpush1.msra.mxu0 0.0
        %793 = vmatprep.subr.mxu0 0.0
        %794 = vmatpush1.msra.mxu0 0.0
        %795 = vmatprep.subr.mxu0 0.0
        %796 = vmatpush1.msra.mxu0 0.0
        %797 = vmatprep.mubr.f32.mxu0 0.0
        %798 = vmatmul.mubr.f32.gmra.mrb[0].mxu0 %v724
        %v799 = vpop.f32.mrb[0].mxu0
        %v800 = vadd.f32 0.0, %v799
        %v801 = vpop.f32.mrb[0].mxu0
        %802 = vmatprep.mubr.f32.mxu0 0.0
        %803 = vmatmul.mubr.f32.gmra.mrb[0].mxu0 %v727
        %v804 = vpop.f32.mrb[0].mxu0
        %v805 = vadd.f32 0.0, %v804
        %v806 = vpop.f32.mrb[0].mxu0
        %807 = vdwg.mxu0
        %v808 = vmul.f32 %v800, %v330
        %v809 = vmul.f32 %v805, %v331
        %810 = vst.msk [vmem:[%s316] sm:$0xff] %vm376, %v808
        %811 = vst.msk [vmem:[%s316 + $0x8] sm:$0xff] %vm376, %v809
        %v812 = vmul.f32 %v800, %v332
        %v813 = vmul.f32 %v805, %v333
        %v814 = vsub.f32 %v332, %v812
        %v815 = vsub.f32 %v333, %v813
        %818 = vrot.lane.b32.xlu0 %v814, 16
        %v819 = vpop.permute.xlu0 %818
        %820 = vrot.lane.b32.xlu0 %v815, 16
        %v821 = vpop.permute.xlu0 %820
        %vm824 = vcmask 261248
        %825 = vst.msk [vmem:[%s316] sm:$0xff] %vm824, %v819
        %826 = vst.msk [vmem:[%s316 + $0x8] sm:$0xff] %vm824, %v821
        %s827 = sand.u32 %s209, 1
        %s828 = scalar_lea.sflag [#allocation4], %s827
        %s829 = sand.u32 %s209, 1
        %s830 = smul.addr %s829, 16
        %s831 = scalar_lea.vmem [#allocation3], %s830
        // Predicated region
        $region53: #{tpu_custom_call.1} parent=51 // pred_check
          %p832 = pneg %p219
        $region54: #{tpu_custom_call.1} parent=51 // pred_check_branch
          %834 = sbr.rel (%p832) target = $region56
        $region55: #{tpu_custom_call.1} parent=51 // pred_region
          %s835 = smul.u32 2, %s23
          %s837 = ssub.s32 256, 256
          %838 = vsyncadd %s828, %s837
          %s839 = smul.addr %s835, 128
          %s840 = scalar_lea.hbm %s8, %s839
          %s841 = sshll.u32 %s831, 4
          %s842 = int_to_ptr.vmem [resolvable:$true] %s841
          %847 = dma.vmem_to_hbm [thread:$0]  %s842, 256, %s840, %s828, 128, 128, 8
        $region56: #{tpu_custom_call.1} parent=51 // pred_fallthru
          _
      $region52: #{tpu_custom_call.1} parent=5 // pred_fallthru
        _
      %p848 = scmp.le.s32.totalorder 2, %s18
      // Predicated region
      $region57: #{tpu_custom_call.1} parent=5 // pred_check
        %p849 = pneg %p848
      $region58: #{tpu_custom_call.1} parent=5 // pred_check_branch
        %851 = sbr.rel (%p849) target = $region60
      $region59: #{tpu_custom_call.1} parent=5 // pred_region
        %s852 = ssub.s32 %s18, 2
        // Predicated region
        $region61: #{tpu_custom_call.1} parent=59 // pred_check
          %p853 = pneg %p225
        $region62: #{tpu_custom_call.1} parent=59 // pred_check_branch
          %855 = sbr.rel (%p853) target = $region64
        $region63: #{tpu_custom_call.1} parent=59 // pred_region
          %s856 = sand.u32 %s210, 1
          %s857 = scalar_lea.sflag [#allocation4], %s856
          %s858 = sand.u32 %s210, 1
          %s859 = smul.addr %s858, 16
          %s860 = scalar_lea.vmem [#allocation3], %s859
          %861 = dma.done %s857, 256
        $region64: #{tpu_custom_call.1} parent=59 // pred_fallthru
          _
      $region60: #{tpu_custom_call.1} parent=5 // pred_fallthru
        _
    $region6: #{tpu_custom_call.1} parent=1 // loop_footer
      %s22 = sadd.s32 1, %s18
    $region7: #{tpu_custom_call.1} parent=1 // loop_footer_branch
      %17 = sbr.rel target = $region3
    $region8: #{tpu_custom_call.1} parent=1 // loop_exit
      _
    %862 = vsyncpa [#allocation4], 1
    %s863 = scalar_lea.sflag [#allocation4], 1
    %864 = vsyncpa %s863, 1

</llo_original>
